<compile_context>
chip_gen: v7x
topology: tpu7x:2x2x1
jax: 0.10.0
libtpu: 0.0.40
codegen_flags: <defaults>
</compile_context>

<pallas_src>
import functools

import jax
import jax.numpy as jnp
from jax import lax
from jax.experimental import pallas as pl
from jax.experimental.pallas import tpu as pltpu

LANE = 128  # TPU lane width: each image's flattened H*W is padded to a multiple
            # of this so per-image lane slices / stores are aligned and dense.


def _round_up(n, m):
    return (n + m - 1) // m * m


# --------------------------------------------------------------------------- #
# Fused Pallas kernel: conv3x3(Cin->F) + ReLU + conv3x3(F->Cout), SAME padding.
# Pixel index (image-major, padded to HWp per image) lives on the lane axis.
# --------------------------------------------------------------------------- #
def _fused_sr_kernel(x_ref, yx_ref, w1t_ref, b1_ref, w2t_ref, b2_ref, o_ref,
                     col1_ref, col2_ref, *, H, W):
    # x_ref:    (Cin, M)  f32   flattened NCHW pixels, M = Bblk*HWp lanes
    # yx_ref:   (2, M)    int32 per-lane (y, x) pixel coords (big-negative = pad)
    # w1t_ref:  (F, 9*Cin)   bf16   transposed im2col conv1 weights
    # b1_ref:   (F, 1)       f32
    # w2t_ref:  (Cout, 9*F)  bf16   transposed im2col conv2 weights
    # b2_ref:   (Cout, 1)    f32
    # o_ref:    (Cout, M)    f32    lane-dense conv2 output
    # col1_ref: (9*Cin, M) f32 scratch; col2_ref: (9*F, M) bf16 scratch
    Cin, M = x_ref.shape
    F = w1t_ref.shape[0]

    yc = yx_ref[0:1, :]                       # (1, M) int32
    xc = yx_ref[1:2, :]

    def taps():
        # tap j = dy*3+dx reads input pixel (y+dy-1, x+dx-1); the mask is the
        # SAME-padding zero border (and kills roll wrap-around / pad lanes).
        for dy in range(3):
            for dx in range(3):
                off = (dy - 1) * W + (dx - 1)
                valid = ((yc >= 1 - dy) & (yc <= H - dy) &
                         (xc >= 1 - dx) & (xc <= W - dx))
                yield off, valid.astype(jnp.float32)

    # ---- conv1 im2col: 9 lane rotations (XLU) of the whole (Cin, M) plane ----
    x_all = x_ref[...]
    for j, (off, mask) in enumerate(taps()):
        src = x_all if off == 0 else pltpu.roll(x_all, (-off) % M, axis=1)
        col1_ref[j * Cin:(j + 1) * Cin, :] = src * mask

    h = jnp.dot(w1t_ref[...], col1_ref[...].astype(jnp.bfloat16),
                preferred_element_type=jnp.float32)            # (F, M)
    h = jnp.maximum(h + b1_ref[...], 0.0)                      # bias + ReLU, f32

    # ---- conv2 im2col from the VMEM-resident hidden activations (bf16) -------
    for j, (off, mask) in enumerate(taps()):
        src = h if off == 0 else pltpu.roll(h, (-off) % M, axis=1)
        col2_ref[j * F:(j + 1) * F, :] = (src * mask).astype(jnp.bfloat16)

    acc = jnp.dot(w2t_ref[...], col2_ref[...],
                  preferred_element_type=jnp.float32)          # (Cout, M)
    o_ref[...] = (acc + b2_ref[...]).astype(o_ref.dtype)       # lane-dense store


def _pick_bblk(B, HWp, target_lanes=4096):
    """Images per grid step: amortise per-step cost / enlarge matmul N, but keep
    >= 2 grid steps when possible so both TensorCores get work on v7x."""
    divisors = [d for d in range(1, B + 1) if B % d == 0]
    good = [d for d in divisors if d * HWp <= target_lanes and B // d >= 2]
    if good:
        return max(good)
    fit = [d for d in divisors if d * HWp <= target_lanes]
    return max(fit) if fit else 1


def fused_sr_forward_nchw(x_nchw, w1t, b1_col, w2t, b2_col):
    """conv3x3 -> ReLU -> conv3x3 (SAME), NCHW in / NCHW out, one fused kernel.

    x_nchw: (B, Cin, H, W) f32  ->  (B, Cout, H, W) f32
    """
    B, Cin, H, W = x_nchw.shape
    F, K1 = w1t.shape
    Cout, K2 = w2t.shape
    assert K1 == 9 * Cin and K2 == 9 * F
    HW = H * W
    HWp = _round_up(HW, LANE)                 # lane-aligned per-image length

    # ---- layout glue (HBM-side, tiny): NCHW -> K-major (Cin, B*HWp) -----------
    x_flat = x_nchw.reshape(B, Cin, HW)
    if HWp != HW:
        x_flat = jnp.pad(x_flat, ((0, 0), (0, 0), (0, HWp - HW)))
    x_km = jnp.transpose(x_flat, (1, 0, 2)).reshape(Cin, B * HWp)

    # Per-lane (y, x) coords drive the SAME-padding masks inside the kernel.
    yy = jnp.repeat(jnp.arange(H, dtype=jnp.int32), W)
    xx = jnp.tile(jnp.arange(W, dtype=jnp.int32), H)
    pad = HWp - HW
    if pad:
        fill = jnp.full((pad,), -(10 ** 6), jnp.int32)
        yy = jnp.concatenate([yy, fill])
        xx = jnp.concatenate([xx, fill])
    coords = jnp.tile(jnp.stack([yy, xx], axis=0), (1, B))      # (2, B*HWp)

    Bblk = _pick_bblk(B, HWp)
    Mblk = Bblk * HWp
    grid = (B // Bblk,)

    # VMEM budget derived from the actual block sizes (double-buffered in/out,
    # im2col staging, f32 temporaries), clamped well under v7x's 64 MiB.
    vmem_bytes = (2 * (Cin + 2 + Cout) * Mblk * 4
                  + K1 * Mblk * 4 + K2 * Mblk * 2
                  + 12 * F * Mblk * 4
                  + (1 << 21))
    vmem_limit = int(min(48 * 1024 * 1024, max(16 * 1024 * 1024, vmem_bytes)))

    # TODO(synk): for large SR frames (v7x's 64 MiB VMEM) or B==1 needing both
    # TensorCores, add a spatial row-block grid axis with 1-row halos; the
    # shapes exercised here fit whole images per grid step comfortably.
    out = pl.pallas_call(
        functools.partial(_fused_sr_kernel, H=H, W=W),
        out_shape=jax.ShapeDtypeStruct((Cout, B * HWp), jnp.float32),
        grid=grid,
        in_specs=[
            pl.BlockSpec((Cin, Mblk), lambda i: (0, i)),
            pl.BlockSpec((2, Mblk), lambda i: (0, i)),
            pl.BlockSpec((F, K1), lambda i: (0, 0)),
            pl.BlockSpec((F, 1), lambda i: (0, 0)),
            pl.BlockSpec((Cout, K2), lambda i: (0, 0)),
            pl.BlockSpec((Cout, 1), lambda i: (0, 0)),
        ],
        out_specs=pl.BlockSpec((Cout, Mblk), lambda i: (0, i)),
        scratch_shapes=[
            pltpu.VMEM((K1, Mblk), jnp.float32),    # conv1 im2col (3-row taps)
            pltpu.VMEM((K2, Mblk), jnp.bfloat16),   # conv2 im2col (16-row taps)
        ],
        compiler_params=pltpu.CompilerParams(
            dimension_semantics=("parallel",),      # batch groups: megacore/2-TC
            vmem_limit_bytes=vmem_limit),
    )(x_km, coords, w1t, b1_col, w2t, b2_col)

    y = out.reshape(Cout, B, HWp)[:, :, :HW]
    return jnp.transpose(y, (1, 0, 2)).reshape(B, Cout, H, W)


def pixel_shuffle_nchw(x, r):
    """PyTorch-style pixel shuffle: (B, C*r*r, H, W) -> (B, C, H*r, W*r)."""
    B, C, H, W = x.shape
    Cout = C // (r * r)
    x = x.reshape(B, Cout, r, r, H, W)
    x = jnp.transpose(x, (0, 1, 4, 2, 5, 3))
    return x.reshape(B, Cout, H * r, W * r)


# --------------------------------------------------------------------------- #
# Inner SR model (deterministic synthetic weights): conv-relu-conv-pixelshuffle
# executed as one fused Pallas kernel per forward.
# --------------------------------------------------------------------------- #
class SimpleSRNet:
    def __init__(self, key, in_ch=3, feats=16, scale=2):
        k1, k2, k3, k4 = jax.random.split(key, 4)
        self.scale = scale
        self.in_ch = in_ch
        self.feats = feats
        self.out_ch = in_ch * scale * scale
        self.w1 = 0.1 * jax.random.normal(k1, (3, 3, in_ch, feats), jnp.float32)
        self.b1 = 0.1 * jax.random.normal(k2, (feats,), jnp.float32)
        self.w2 = 0.1 * jax.random.normal(k3, (3, 3, feats, self.out_ch),
                                          jnp.float32)
        self.b2 = 0.1 * jax.random.normal(k4, (self.out_ch,), jnp.float32)
        # K-major, transposed, bf16 weights for the fused kernel (f32 accumulate)
        # -- no 128-lane output padding on conv2.
        self.w1t = self.w1.reshape(9 * in_ch, feats).T.astype(jnp.bfloat16)
        self.w2t = self.w2.reshape(9 * feats, self.out_ch).T.astype(jnp.bfloat16)
        self.b1_col = self.b1.reshape(feats, 1)
        self.b2_col = self.b2.reshape(self.out_ch, 1)

    def __call__(self, x_nchw):
        y = fused_sr_forward_nchw(x_nchw, self.w1t, self.b1_col,
                                  self.w2t, self.b2_col)
        return pixel_shuffle_nchw(y, self.scale)


# --------------------------------------------------------------------------- #
# Pure-JAX reference (for correctness check of the Pallas path).
# --------------------------------------------------------------------------- #
def _reference_model(x_nchw, net):
    xh = jnp.transpose(x_nchw, (0, 2, 3, 1))

    def conv(v, w, b):
        return lax.conv_general_dilated(
            v, w, (1, 1), 'SAME',
            dimension_numbers=('NHWC', 'HWIO', 'NHWC'),
            precision=jax.lax.Precision.HIGHEST) + b

    h = jnp.maximum(conv(xh, net.w1, net.b1), 0.0)
    y = conv(h, net.w2, net.b2)
    y = jnp.transpose(y, (0, 3, 1, 2))
    return pixel_shuffle_nchw(y, net.scale)


# --------------------------------------------------------------------------- #
# SRModel wrapper: faithful port of the PyTorch forward / forward_x8 /
# forward_chop (augmentations / same-shape patches batched into single calls).
# --------------------------------------------------------------------------- #
class SRModel:
    def __init__(self, model, scale_factor, chop, self_ensemble):
        self.scale = scale_factor
        self.self_ensemble = self_ensemble
        self.chop = chop
        self.precision = 'single'
        self.model = model
        self.training = False  # inference-mode semantics

    def __call__(self, x):
        return self.forward(x)

    def forward(self, x):
        if self.self_ensemble and (not self.training):
            if self.chop:
                forward_function = self.forward_chop
            else:
                forward_function = self.model
            return self.forward_x8(x, forward_function)
        elif self.chop and (not self.training):
            return self.forward_chop(x)
        else:
            return self.model(x)

    def forward_x8(self, x, forward_function):
        def _transform(v, op):
            if op == 'v':
                return v[:, :, :, ::-1]
            elif op == 'h':
                return v[:, :, ::-1, :]
            elif op == 't':
                return jnp.transpose(v, (0, 1, 3, 2))

        lr_list = [x]
        for tf in ('v', 'h', 't'):
            lr_list.extend([_transform(t, tf) for t in lr_list])

        b = x.shape[0]
        if x.shape[2] == x.shape[3]:
            # Square input: run ALL 8 augmentations as one batched forward
            # (8x fewer kernel launches, long parallel batch grid).
            sr_stacked = forward_function(jnp.concatenate(lr_list, axis=0))
            sr_list = [sr_stacked[i * b:(i + 1) * b] for i in range(8)]
        else:
            # 't' changes the spatial shape for non-square inputs.
            sr_list = [forward_function(aug) for aug in lr_list]

        for i in range(len(sr_list)):
            if i > 3:
                sr_list[i] = _transform(sr_list[i], 't')
            if i % 4 > 1:
                sr_list[i] = _transform(sr_list[i], 'h')
            if i % 4 % 2 == 1:
                sr_list[i] = _transform(sr_list[i], 'v')
        output_cat = jnp.concatenate(sr_list, axis=0)
        # NOTE: like the original EDSR code, the mean is over the whole batch
        # axis, so forward_x8 is only meaningful for batch size 1.
        output = jnp.mean(output_cat, axis=0, keepdims=True)
        return output

    def forward_chop(self, x, shave=10, min_size=3600):
        scale = self.scale
        b, c, h, w = x.shape
        h_half, w_half = h // 2, w // 2
        h_size, w_size = h_half + shave, w_half + shave
        h_size += scale - h_size % scale
        w_size += scale - w_size % scale
        lr_list = [
            x[:, :, 0:h_size, 0:w_size],
            x[:, :, 0:h_size, w - w_size:w],
            x[:, :, h - h_size:h, 0:w_size],
            x[:, :, h - h_size:h, w - w_size:w],
        ]
        if w_size * h_size < min_size:
            # The four patches share a shape: batch them through ONE model call.
            sr_batch = self.model(jnp.concatenate(lr_list, axis=0))
            sr_list = [sr_batch[i * b:(i + 1) * b] for i in range(4)]
        else:
            sr_list = [self.forward_chop(patch, shave=shave, min_size=min_size)
                       for patch in lr_list]
        h, w = scale * h, scale * w
        h_half, w_half = scale * h_half, scale * w_half
        h_size, w_size = scale * h_size, scale * w_size
        shave *= scale
        output = jnp.zeros((b, c, h, w), x.dtype)
        output = output.at[:, :, 0:h_half, 0:w_half].set(
            sr_list[0][:, :, 0:h_half, 0:w_half])
        output = output.at[:, :, 0:h_half, w_half:w].set(
            sr_list[1][:, :, 0:h_half, w_size - w + w_half:w_size])
        output = output.at[:, :, h_half:h, 0:w_half].set(
            sr_list[2][:, :, h_size - h + h_half:h_size, 0:w_half])
        output = output.at[:, :, h_half:h, w_half:w].set(
            sr_list[3][:, :, h_size - h + h_half:h_size,
                       w_size - w + w_half:w_size])
        return output


# --------------------------------------------------------------------------- #
if __name__ == "__main__":
    key = jax.random.PRNGKey(0)
    kmodel, kx1, kx2, kx3 = jax.random.split(key, 4)

    scale = 2
    net = SimpleSRNet(kmodel, in_ch=3, feats=16, scale=scale)

    # ---- plain path (chop=False, self_ensemble=False), NCHW batch=2 ----------
    x = jax.random.normal(kx1, (2, 3, 16, 16), jnp.float32)
    sr_plain = SRModel(net, scale_factor=scale, chop=False, self_ensemble=False)
    y_plain = jax.block_until_ready(sr_plain(x))
    assert y_plain.shape == (2, 3, 32, 32), y_plain.shape
    y_ref = _reference_model(x, net)
    # Tolerance covers bf16 MXU operands (f32 accumulate) vs HIGHEST-precision
    # f32 XLA convolution reference.
    assert bool(jnp.allclose(y_plain, y_ref, atol=5e-2, rtol=5e-2)), \
        float(jnp.max(jnp.abs(y_plain - y_ref)))

    # ---- x8 self-ensemble path (batch=1: original code averages over batch) --
    x1 = jax.random.normal(kx2, (1, 3, 16, 16), jnp.float32)
    sr_x8 = SRModel(net, scale_factor=scale, chop=False, self_ensemble=True)
    y_x8 = jax.block_until_ready(sr_x8(x1))
    assert y_x8.shape == (1, 3, 32, 32), y_x8.shape
    assert bool(jnp.isfinite(y_x8).all())

    # ---- chop path on a 48x48 input (shave=10 exceeds the receptive field) ---
    x48 = jax.random.normal(kx3, (1, 3, 48, 48), jnp.float32)
    sr_chop = SRModel(net, scale_factor=scale, chop=True, self_ensemble=False)
    y_chop = jax.block_until_ready(sr_chop(x48))
    assert y_chop.shape == (1, 3, 96, 96), y_chop.shape
    y_full = jax.block_until_ready(net(x48))
    # Patch overlap exceeds the conv receptive field, so chop == full model.
    assert bool(jnp.allclose(y_chop, y_full, atol=1e-3, rtol=1e-3)), \
        float(jnp.max(jnp.abs(y_chop - y_full)))

    print("KERNEL_OK")
</pallas_src>

<mosaic_0001>
module attributes {stable_mosaic.version = 11 : i64} {
  func.func @_fused_sr_kernel(%arg0: i32, %arg1: memref<3x256xf32, #tpu.memory_space<vmem>>, %arg2: memref<2x256xi32, #tpu.memory_space<vmem>>, %arg3: memref<16x27xbf16, #tpu.memory_space<vmem>>, %arg4: memref<16x1xf32, #tpu.memory_space<vmem>>, %arg5: memref<12x144xbf16, #tpu.memory_space<vmem>>, %arg6: memref<12x1xf32, #tpu.memory_space<vmem>>, %arg7: memref<12x256xf32, #tpu.memory_space<vmem>>, %arg8: memref<27x256xf32, #tpu.memory_space<vmem>>, %arg9: memref<144x256xbf16, #tpu.memory_space<vmem>>) attributes {dimension_semantics = [#tpu.dimension_semantics<parallel>], iteration_bounds = array<i64: 2>, scalar_prefetch = 0 : i64, scratch_operands = 2 : i64, tpu.core_type = #tpu.core_type<tc>, window_params = [{transform_indices = @transform_0, window_bounds = array<i64: 3, 256>}, {transform_indices = @transform_1, window_bounds = array<i64: 2, 256>}, {pipeline_mode = #tpu.pipeline_mode<synchronous>, transform_indices = @transform_2, window_bounds = array<i64: 16, 27>}, {pipeline_mode = #tpu.pipeline_mode<synchronous>, transform_indices = @transform_3, window_bounds = array<i64: 16, 1>}, {pipeline_mode = #tpu.pipeline_mode<synchronous>, transform_indices = @transform_4, window_bounds = array<i64: 12, 144>}, {pipeline_mode = #tpu.pipeline_mode<synchronous>, transform_indices = @transform_5, window_bounds = array<i64: 12, 1>}, {transform_indices = @transform_6, window_bounds = array<i64: 12, 256>}]} {
    %c0 = arith.constant 0 : index
    %c0_0 = arith.constant 0 : index
    %0 = vector.load %arg2[%c0, %c0_0] : memref<2x256xi32, #tpu.memory_space<vmem>>, vector<1x256xi32>
    %c1 = arith.constant 1 : index
    %c0_1 = arith.constant 0 : index
    %1 = vector.load %arg2[%c1, %c0_1] : memref<2x256xi32, #tpu.memory_space<vmem>>, vector<1x256xi32>
    %c0_2 = arith.constant 0 : index
    %c0_3 = arith.constant 0 : index
    %2 = vector.load %arg1[%c0_2, %c0_3] : memref<3x256xf32, #tpu.memory_space<vmem>>, vector<3x256xf32>
    %c1_i32 = arith.constant 1 : i32
    %3 = vector.broadcast %c1_i32 : i32 to vector<1x256xi32>
    %4 = arith.cmpi sge, %0, %3 : vector<1x256xi32>
    %c16_i32 = arith.constant 16 : i32
    %5 = vector.broadcast %c16_i32 : i32 to vector<1x256xi32>
    %6 = arith.cmpi sle, %0, %5 : vector<1x256xi32>
    %7 = arith.andi %4, %6 : vector<1x256xi1>
    %c1_i32_4 = arith.constant 1 : i32
    %8 = vector.broadcast %c1_i32_4 : i32 to vector<1x256xi32>
    %9 = arith.cmpi sge, %1, %8 : vector<1x256xi32>
    %10 = arith.andi %7, %9 : vector<1x256xi1>
    %c16_i32_5 = arith.constant 16 : i32
    %11 = vector.broadcast %c16_i32_5 : i32 to vector<1x256xi32>
    %12 = arith.cmpi sle, %1, %11 : vector<1x256xi32>
    %13 = arith.andi %10, %12 : vector<1x256xi1>
    %14 = arith.extui %13 : vector<1x256xi1> to vector<1x256xi32>
    %15 = arith.sitofp %14 : vector<1x256xi32> to vector<1x256xf32>
    %c17_i32 = arith.constant 17 : i32
    %16 = tpu.dynamic_rotate %2 by %c17_i32 dim 1 : vector<3x256xf32>, i32 -> vector<3x256xf32>
    %17 = vector.broadcast %15 : vector<1x256xf32> to vector<3x256xf32>
    %18 = arith.mulf %16, %17 : vector<3x256xf32>
    %c0_6 = arith.constant 0 : index
    %c0_7 = arith.constant 0 : index
    %19 = vector.load %arg8[%c0_6, %c0_7] : memref<27x256xf32, #tpu.memory_space<vmem>>, vector<3x256xf32>
    tpu.vector_store %arg8[%c0_6, %c0_7], %18 {strides = array<i32>} : memref<27x256xf32, #tpu.memory_space<vmem>>, vector<3x256xf32>,
    %c1_i32_8 = arith.constant 1 : i32
    %20 = vector.broadcast %c1_i32_8 : i32 to vector<1x256xi32>
    %21 = arith.cmpi sge, %0, %20 : vector<1x256xi32>
    %c16_i32_9 = arith.constant 16 : i32
    %22 = vector.broadcast %c16_i32_9 : i32 to vector<1x256xi32>
    %23 = arith.cmpi sle, %0, %22 : vector<1x256xi32>
    %24 = arith.andi %21, %23 : vector<1x256xi1>
    %c0_i32 = arith.constant 0 : i32
    %25 = vector.broadcast %c0_i32 : i32 to vector<1x256xi32>
    %26 = arith.cmpi sge, %1, %25 : vector<1x256xi32>
    %27 = arith.andi %24, %26 : vector<1x256xi1>
    %c15_i32 = arith.constant 15 : i32
    %28 = vector.broadcast %c15_i32 : i32 to vector<1x256xi32>
    %29 = arith.cmpi sle, %1, %28 : vector<1x256xi32>
    %30 = arith.andi %27, %29 : vector<1x256xi1>
    %31 = arith.extui %30 : vector<1x256xi1> to vector<1x256xi32>
    %32 = arith.sitofp %31 : vector<1x256xi32> to vector<1x256xf32>
    %c16_i32_10 = arith.constant 16 : i32
    %33 = tpu.dynamic_rotate %2 by %c16_i32_10 dim 1 : vector<3x256xf32>, i32 -> vector<3x256xf32>
    %34 = vector.broadcast %32 : vector<1x256xf32> to vector<3x256xf32>
    %35 = arith.mulf %33, %34 : vector<3x256xf32>
    %c3 = arith.constant 3 : index
    %c0_11 = arith.constant 0 : index
    %36 = vector.load %arg8[%c3, %c0_11] : memref<27x256xf32, #tpu.memory_space<vmem>>, vector<3x256xf32>
    tpu.vector_store %arg8[%c3, %c0_11], %35 {strides = array<i32>} : memref<27x256xf32, #tpu.memory_space<vmem>>, vector<3x256xf32>,
    %c1_i32_12 = arith.constant 1 : i32
    %37 = vector.broadcast %c1_i32_12 : i32 to vector<1x256xi32>
    %38 = arith.cmpi sge, %0, %37 : vector<1x256xi32>
    %c16_i32_13 = arith.constant 16 : i32
    %39 = vector.broadcast %c16_i32_13 : i32 to vector<1x256xi32>
    %40 = arith.cmpi sle, %0, %39 : vector<1x256xi32>
    %41 = arith.andi %38, %40 : vector<1x256xi1>
    %c-1_i32 = arith.constant -1 : i32
    %42 = vector.broadcast %c-1_i32 : i32 to vector<1x256xi32>
    %43 = arith.cmpi sge, %1, %42 : vector<1x256xi32>
    %44 = arith.andi %41, %43 : vector<1x256xi1>
    %c14_i32 = arith.constant 14 : i32
    %45 = vector.broadcast %c14_i32 : i32 to vector<1x256xi32>
    %46 = arith.cmpi sle, %1, %45 : vector<1x256xi32>
    %47 = arith.andi %44, %46 : vector<1x256xi1>
    %48 = arith.extui %47 : vector<1x256xi1> to vector<1x256xi32>
    %49 = arith.sitofp %48 : vector<1x256xi32> to vector<1x256xf32>
    %c15_i32_14 = arith.constant 15 : i32
    %50 = tpu.dynamic_rotate %2 by %c15_i32_14 dim 1 : vector<3x256xf32>, i32 -> vector<3x256xf32>
    %51 = vector.broadcast %49 : vector<1x256xf32> to vector<3x256xf32>
    %52 = arith.mulf %50, %51 : vector<3x256xf32>
    %c6 = arith.constant 6 : index
    %c0_15 = arith.constant 0 : index
    %53 = vector.load %arg8[%c6, %c0_15] : memref<27x256xf32, #tpu.memory_space<vmem>>, vector<3x256xf32>
    tpu.vector_store %arg8[%c6, %c0_15], %52 {strides = array<i32>} : memref<27x256xf32, #tpu.memory_space<vmem>>, vector<3x256xf32>,
    %c0_i32_16 = arith.constant 0 : i32
    %54 = vector.broadcast %c0_i32_16 : i32 to vector<1x256xi32>
    %55 = arith.cmpi sge, %0, %54 : vector<1x256xi32>
    %c15_i32_17 = arith.constant 15 : i32
    %56 = vector.broadcast %c15_i32_17 : i32 to vector<1x256xi32>
    %57 = arith.cmpi sle, %0, %56 : vector<1x256xi32>
    %58 = arith.andi %55, %57 : vector<1x256xi1>
    %c1_i32_18 = arith.constant 1 : i32
    %59 = vector.broadcast %c1_i32_18 : i32 to vector<1x256xi32>
    %60 = arith.cmpi sge, %1, %59 : vector<1x256xi32>
    %61 = arith.andi %58, %60 : vector<1x256xi1>
    %c16_i32_19 = arith.constant 16 : i32
    %62 = vector.broadcast %c16_i32_19 : i32 to vector<1x256xi32>
    %63 = arith.cmpi sle, %1, %62 : vector<1x256xi32>
    %64 = arith.andi %61, %63 : vector<1x256xi1>
    %65 = arith.extui %64 : vector<1x256xi1> to vector<1x256xi32>
    %66 = arith.sitofp %65 : vector<1x256xi32> to vector<1x256xf32>
    %c1_i32_20 = arith.constant 1 : i32
    %67 = tpu.dynamic_rotate %2 by %c1_i32_20 dim 1 : vector<3x256xf32>, i32 -> vector<3x256xf32>
    %68 = vector.broadcast %66 : vector<1x256xf32> to vector<3x256xf32>
    %69 = arith.mulf %67, %68 : vector<3x256xf32>
    %c9 = arith.constant 9 : index
    %c0_21 = arith.constant 0 : index
    %70 = vector.load %arg8[%c9, %c0_21] : memref<27x256xf32, #tpu.memory_space<vmem>>, vector<3x256xf32>
    tpu.vector_store %arg8[%c9, %c0_21], %69 {strides = array<i32>} : memref<27x256xf32, #tpu.memory_space<vmem>>, vector<3x256xf32>,
    %c0_i32_22 = arith.constant 0 : i32
    %71 = vector.broadcast %c0_i32_22 : i32 to vector<1x256xi32>
    %72 = arith.cmpi sge, %0, %71 : vector<1x256xi32>
    %c15_i32_23 = arith.constant 15 : i32
    %73 = vector.broadcast %c15_i32_23 : i32 to vector<1x256xi32>
    %74 = arith.cmpi sle, %0, %73 : vector<1x256xi32>
    %75 = arith.andi %72, %74 : vector<1x256xi1>
    %c0_i32_24 = arith.constant 0 : i32
    %76 = vector.broadcast %c0_i32_24 : i32 to vector<1x256xi32>
    %77 = arith.cmpi sge, %1, %76 : vector<1x256xi32>
    %78 = arith.andi %75, %77 : vector<1x256xi1>
    %c15_i32_25 = arith.constant 15 : i32
    %79 = vector.broadcast %c15_i32_25 : i32 to vector<1x256xi32>
    %80 = arith.cmpi sle, %1, %79 : vector<1x256xi32>
    %81 = arith.andi %78, %80 : vector<1x256xi1>
    %82 = arith.extui %81 : vector<1x256xi1> to vector<1x256xi32>
    %83 = arith.sitofp %82 : vector<1x256xi32> to vector<1x256xf32>
    %84 = vector.broadcast %83 : vector<1x256xf32> to vector<3x256xf32>
    %85 = arith.mulf %2, %84 : vector<3x256xf32>
    %c12 = arith.constant 12 : index
    %c0_26 = arith.constant 0 : index
    %86 = vector.load %arg8[%c12, %c0_26] : memref<27x256xf32, #tpu.memory_space<vmem>>, vector<3x256xf32>
    tpu.vector_store %arg8[%c12, %c0_26], %85 {strides = array<i32>} : memref<27x256xf32, #tpu.memory_space<vmem>>, vector<3x256xf32>,
    %c0_i32_27 = arith.constant 0 : i32
    %87 = vector.broadcast %c0_i32_27 : i32 to vector<1x256xi32>
    %88 = arith.cmpi sge, %0, %87 : vector<1x256xi32>
    %c15_i32_28 = arith.constant 15 : i32
    %89 = vector.broadcast %c15_i32_28 : i32 to vector<1x256xi32>
    %90 = arith.cmpi sle, %0, %89 : vector<1x256xi32>
    %91 = arith.andi %88, %90 : vector<1x256xi1>
    %c-1_i32_29 = arith.constant -1 : i32
    %92 = vector.broadcast %c-1_i32_29 : i32 to vector<1x256xi32>
    %93 = arith.cmpi sge, %1, %92 : vector<1x256xi32>
    %94 = arith.andi %91, %93 : vector<1x256xi1>
    %c14_i32_30 = arith.constant 14 : i32
    %95 = vector.broadcast %c14_i32_30 : i32 to vector<1x256xi32>
    %96 = arith.cmpi sle, %1, %95 : vector<1x256xi32>
    %97 = arith.andi %94, %96 : vector<1x256xi1>
    %98 = arith.extui %97 : vector<1x256xi1> to vector<1x256xi32>
    %99 = arith.sitofp %98 : vector<1x256xi32> to vector<1x256xf32>
    %c255_i32 = arith.constant 255 : i32
    %100 = tpu.dynamic_rotate %2 by %c255_i32 dim 1 : vector<3x256xf32>, i32 -> vector<3x256xf32>
    %101 = vector.broadcast %99 : vector<1x256xf32> to vector<3x256xf32>
    %102 = arith.mulf %100, %101 : vector<3x256xf32>
    %c15 = arith.constant 15 : index
    %c0_31 = arith.constant 0 : index
    %103 = vector.load %arg8[%c15, %c0_31] : memref<27x256xf32, #tpu.memory_space<vmem>>, vector<3x256xf32>
    tpu.vector_store %arg8[%c15, %c0_31], %102 {strides = array<i32>} : memref<27x256xf32, #tpu.memory_space<vmem>>, vector<3x256xf32>,
    %c-1_i32_32 = arith.constant -1 : i32
    %104 = vector.broadcast %c-1_i32_32 : i32 to vector<1x256xi32>
    %105 = arith.cmpi sge, %0, %104 : vector<1x256xi32>
    %c14_i32_33 = arith.constant 14 : i32
    %106 = vector.broadcast %c14_i32_33 : i32 to vector<1x256xi32>
    %107 = arith.cmpi sle, %0, %106 : vector<1x256xi32>
    %108 = arith.andi %105, %107 : vector<1x256xi1>
    %c1_i32_34 = arith.constant 1 : i32
    %109 = vector.broadcast %c1_i32_34 : i32 to vector<1x256xi32>
    %110 = arith.cmpi sge, %1, %109 : vector<1x256xi32>
    %111 = arith.andi %108, %110 : vector<1x256xi1>
    %c16_i32_35 = arith.constant 16 : i32
    %112 = vector.broadcast %c16_i32_35 : i32 to vector<1x256xi32>
    %113 = arith.cmpi sle, %1, %112 : vector<1x256xi32>
    %114 = arith.andi %111, %113 : vector<1x256xi1>
    %115 = arith.extui %114 : vector<1x256xi1> to vector<1x256xi32>
    %116 = arith.sitofp %115 : vector<1x256xi32> to vector<1x256xf32>
    %c241_i32 = arith.constant 241 : i32
    %117 = tpu.dynamic_rotate %2 by %c241_i32 dim 1 : vector<3x256xf32>, i32 -> vector<3x256xf32>
    %118 = vector.broadcast %116 : vector<1x256xf32> to vector<3x256xf32>
    %119 = arith.mulf %117, %118 : vector<3x256xf32>
    %c18 = arith.constant 18 : index
    %c0_36 = arith.constant 0 : index
    %120 = vector.load %arg8[%c18, %c0_36] : memref<27x256xf32, #tpu.memory_space<vmem>>, vector<3x256xf32>
    tpu.vector_store %arg8[%c18, %c0_36], %119 {strides = array<i32>} : memref<27x256xf32, #tpu.memory_space<vmem>>, vector<3x256xf32>,
    %c-1_i32_37 = arith.constant -1 : i32
    %121 = vector.broadcast %c-1_i32_37 : i32 to vector<1x256xi32>
    %122 = arith.cmpi sge, %0, %121 : vector<1x256xi32>
    %c14_i32_38 = arith.constant 14 : i32
    %123 = vector.broadcast %c14_i32_38 : i32 to vector<1x256xi32>
    %124 = arith.cmpi sle, %0, %123 : vector<1x256xi32>
    %125 = arith.andi %122, %124 : vector<1x256xi1>
    %c0_i32_39 = arith.constant 0 : i32
    %126 = vector.broadcast %c0_i32_39 : i32 to vector<1x256xi32>
    %127 = arith.cmpi sge, %1, %126 : vector<1x256xi32>
    %128 = arith.andi %125, %127 : vector<1x256xi1>
    %c15_i32_40 = arith.constant 15 : i32
    %129 = vector.broadcast %c15_i32_40 : i32 to vector<1x256xi32>
    %130 = arith.cmpi sle, %1, %129 : vector<1x256xi32>
    %131 = arith.andi %128, %130 : vector<1x256xi1>
    %132 = arith.extui %131 : vector<1x256xi1> to vector<1x256xi32>
    %133 = arith.sitofp %132 : vector<1x256xi32> to vector<1x256xf32>
    %c240_i32 = arith.constant 240 : i32
    %134 = tpu.dynamic_rotate %2 by %c240_i32 dim 1 : vector<3x256xf32>, i32 -> vector<3x256xf32>
    %135 = vector.broadcast %133 : vector<1x256xf32> to vector<3x256xf32>
    %136 = arith.mulf %134, %135 : vector<3x256xf32>
    %c21 = arith.constant 21 : index
    %c0_41 = arith.constant 0 : index
    %137 = vector.load %arg8[%c21, %c0_41] : memref<27x256xf32, #tpu.memory_space<vmem>>, vector<3x256xf32>
    tpu.vector_store %arg8[%c21, %c0_41], %136 {strides = array<i32>} : memref<27x256xf32, #tpu.memory_space<vmem>>, vector<3x256xf32>,
    %c-1_i32_42 = arith.constant -1 : i32
    %138 = vector.broadcast %c-1_i32_42 : i32 to vector<1x256xi32>
    %139 = arith.cmpi sge, %0, %138 : vector<1x256xi32>
    %c14_i32_43 = arith.constant 14 : i32
    %140 = vector.broadcast %c14_i32_43 : i32 to vector<1x256xi32>
    %141 = arith.cmpi sle, %0, %140 : vector<1x256xi32>
    %142 = arith.andi %139, %141 : vector<1x256xi1>
    %c-1_i32_44 = arith.constant -1 : i32
    %143 = vector.broadcast %c-1_i32_44 : i32 to vector<1x256xi32>
    %144 = arith.cmpi sge, %1, %143 : vector<1x256xi32>
    %145 = arith.andi %142, %144 : vector<1x256xi1>
    %c14_i32_45 = arith.constant 14 : i32
    %146 = vector.broadcast %c14_i32_45 : i32 to vector<1x256xi32>
    %147 = arith.cmpi sle, %1, %146 : vector<1x256xi32>
    %148 = arith.andi %145, %147 : vector<1x256xi1>
    %149 = arith.extui %148 : vector<1x256xi1> to vector<1x256xi32>
    %150 = arith.sitofp %149 : vector<1x256xi32> to vector<1x256xf32>
    %c239_i32 = arith.constant 239 : i32
    %151 = tpu.dynamic_rotate %2 by %c239_i32 dim 1 : vector<3x256xf32>, i32 -> vector<3x256xf32>
    %152 = vector.broadcast %150 : vector<1x256xf32> to vector<3x256xf32>
    %153 = arith.mulf %151, %152 : vector<3x256xf32>
    %c24 = arith.constant 24 : index
    %c0_46 = arith.constant 0 : index
    %154 = vector.load %arg8[%c24, %c0_46] : memref<27x256xf32, #tpu.memory_space<vmem>>, vector<3x256xf32>
    tpu.vector_store %arg8[%c24, %c0_46], %153 {strides = array<i32>} : memref<27x256xf32, #tpu.memory_space<vmem>>, vector<3x256xf32>,
    %c0_47 = arith.constant 0 : index
    %c0_48 = arith.constant 0 : index
    %155 = vector.load %arg3[%c0_47, %c0_48] : memref<16x27xbf16, #tpu.memory_space<vmem>>, vector<16x27xbf16>
    %c0_49 = arith.constant 0 : index
    %c0_50 = arith.constant 0 : index
    %156 = vector.load %arg8[%c0_49, %c0_50] : memref<27x256xf32, #tpu.memory_space<vmem>>, vector<27x256xf32>
    %157 = arith.truncf %156 : vector<27x256xf32> to vector<27x256xbf16>
    %cst = arith.constant dense<0.000000e+00> : vector<16x256xf32>
    %158 = tpu.matmul %155, %157, %cst {dimension_numbers = #tpu.dot_dimension_numbers<[1], [0], [0], [1], [0, 0, 1, 1], [], []>} : vector<16x27xbf16>, vector<27x256xbf16>, vector<16x256xf32> -> vector<16x256xf32>
    %c0_51 = arith.constant 0 : index
    %c0_52 = arith.constant 0 : index
    %159 = vector.load %arg4[%c0_51, %c0_52] : memref<16x1xf32, #tpu.memory_space<vmem>>, vector<16x1xf32>
    %160 = vector.broadcast %159 : vector<16x1xf32> to vector<16x256xf32>
    %161 = arith.addf %158, %160 : vector<16x256xf32>
    %cst_53 = arith.constant 0.000000e+00 : f32
    %162 = vector.broadcast %cst_53 : f32 to vector<16x256xf32>
    %163 = arith.maximumf %161, %162 : vector<16x256xf32>
    %c1_i32_54 = arith.constant 1 : i32
    %164 = vector.broadcast %c1_i32_54 : i32 to vector<1x256xi32>
    %165 = arith.cmpi sge, %0, %164 : vector<1x256xi32>
    %c16_i32_55 = arith.constant 16 : i32
    %166 = vector.broadcast %c16_i32_55 : i32 to vector<1x256xi32>
    %167 = arith.cmpi sle, %0, %166 : vector<1x256xi32>
    %168 = arith.andi %165, %167 : vector<1x256xi1>
    %c1_i32_56 = arith.constant 1 : i32
    %169 = vector.broadcast %c1_i32_56 : i32 to vector<1x256xi32>
    %170 = arith.cmpi sge, %1, %169 : vector<1x256xi32>
    %171 = arith.andi %168, %170 : vector<1x256xi1>
    %c16_i32_57 = arith.constant 16 : i32
    %172 = vector.broadcast %c16_i32_57 : i32 to vector<1x256xi32>
    %173 = arith.cmpi sle, %1, %172 : vector<1x256xi32>
    %174 = arith.andi %171, %173 : vector<1x256xi1>
    %175 = arith.extui %174 : vector<1x256xi1> to vector<1x256xi32>
    %176 = arith.sitofp %175 : vector<1x256xi32> to vector<1x256xf32>
    %c17_i32_58 = arith.constant 17 : i32
    %177 = tpu.dynamic_rotate %163 by %c17_i32_58 dim 1 : vector<16x256xf32>, i32 -> vector<16x256xf32>
    %178 = vector.broadcast %176 : vector<1x256xf32> to vector<16x256xf32>
    %179 = arith.mulf %177, %178 : vector<16x256xf32>
    %180 = arith.truncf %179 : vector<16x256xf32> to vector<16x256xbf16>
    %c0_59 = arith.constant 0 : index
    %c0_60 = arith.constant 0 : index
    %181 = vector.load %arg9[%c0_59, %c0_60] : memref<144x256xbf16, #tpu.memory_space<vmem>>, vector<16x256xbf16>
    tpu.vector_store %arg9[%c0_59, %c0_60], %180 {strides = array<i32>} : memref<144x256xbf16, #tpu.memory_space<vmem>>, vector<16x256xbf16>,
    %c1_i32_61 = arith.constant 1 : i32
    %182 = vector.broadcast %c1_i32_61 : i32 to vector<1x256xi32>
    %183 = arith.cmpi sge, %0, %182 : vector<1x256xi32>
    %c16_i32_62 = arith.constant 16 : i32
    %184 = vector.broadcast %c16_i32_62 : i32 to vector<1x256xi32>
    %185 = arith.cmpi sle, %0, %184 : vector<1x256xi32>
    %186 = arith.andi %183, %185 : vector<1x256xi1>
    %c0_i32_63 = arith.constant 0 : i32
    %187 = vector.broadcast %c0_i32_63 : i32 to vector<1x256xi32>
    %188 = arith.cmpi sge, %1, %187 : vector<1x256xi32>
    %189 = arith.andi %186, %188 : vector<1x256xi1>
    %c15_i32_64 = arith.constant 15 : i32
    %190 = vector.broadcast %c15_i32_64 : i32 to vector<1x256xi32>
    %191 = arith.cmpi sle, %1, %190 : vector<1x256xi32>
    %192 = arith.andi %189, %191 : vector<1x256xi1>
    %193 = arith.extui %192 : vector<1x256xi1> to vector<1x256xi32>
    %194 = arith.sitofp %193 : vector<1x256xi32> to vector<1x256xf32>
    %c16_i32_65 = arith.constant 16 : i32
    %195 = tpu.dynamic_rotate %163 by %c16_i32_65 dim 1 : vector<16x256xf32>, i32 -> vector<16x256xf32>
    %196 = vector.broadcast %194 : vector<1x256xf32> to vector<16x256xf32>
    %197 = arith.mulf %195, %196 : vector<16x256xf32>
    %198 = arith.truncf %197 : vector<16x256xf32> to vector<16x256xbf16>
    %c16 = arith.constant 16 : index
    %c0_66 = arith.constant 0 : index
    %199 = vector.load %arg9[%c16, %c0_66] : memref<144x256xbf16, #tpu.memory_space<vmem>>, vector<16x256xbf16>
    tpu.vector_store %arg9[%c16, %c0_66], %198 {strides = array<i32>} : memref<144x256xbf16, #tpu.memory_space<vmem>>, vector<16x256xbf16>,
    %c1_i32_67 = arith.constant 1 : i32
    %200 = vector.broadcast %c1_i32_67 : i32 to vector<1x256xi32>
    %201 = arith.cmpi sge, %0, %200 : vector<1x256xi32>
    %c16_i32_68 = arith.constant 16 : i32
    %202 = vector.broadcast %c16_i32_68 : i32 to vector<1x256xi32>
    %203 = arith.cmpi sle, %0, %202 : vector<1x256xi32>
    %204 = arith.andi %201, %203 : vector<1x256xi1>
    %c-1_i32_69 = arith.constant -1 : i32
    %205 = vector.broadcast %c-1_i32_69 : i32 to vector<1x256xi32>
    %206 = arith.cmpi sge, %1, %205 : vector<1x256xi32>
    %207 = arith.andi %204, %206 : vector<1x256xi1>
    %c14_i32_70 = arith.constant 14 : i32
    %208 = vector.broadcast %c14_i32_70 : i32 to vector<1x256xi32>
    %209 = arith.cmpi sle, %1, %208 : vector<1x256xi32>
    %210 = arith.andi %207, %209 : vector<1x256xi1>
    %211 = arith.extui %210 : vector<1x256xi1> to vector<1x256xi32>
    %212 = arith.sitofp %211 : vector<1x256xi32> to vector<1x256xf32>
    %c15_i32_71 = arith.constant 15 : i32
    %213 = tpu.dynamic_rotate %163 by %c15_i32_71 dim 1 : vector<16x256xf32>, i32 -> vector<16x256xf32>
    %214 = vector.broadcast %212 : vector<1x256xf32> to vector<16x256xf32>
    %215 = arith.mulf %213, %214 : vector<16x256xf32>
    %216 = arith.truncf %215 : vector<16x256xf32> to vector<16x256xbf16>
    %c32 = arith.constant 32 : index
    %c0_72 = arith.constant 0 : index
    %217 = vector.load %arg9[%c32, %c0_72] : memref<144x256xbf16, #tpu.memory_space<vmem>>, vector<16x256xbf16>
    tpu.vector_store %arg9[%c32, %c0_72], %216 {strides = array<i32>} : memref<144x256xbf16, #tpu.memory_space<vmem>>, vector<16x256xbf16>,
    %c0_i32_73 = arith.constant 0 : i32
    %218 = vector.broadcast %c0_i32_73 : i32 to vector<1x256xi32>
    %219 = arith.cmpi sge, %0, %218 : vector<1x256xi32>
    %c15_i32_74 = arith.constant 15 : i32
    %220 = vector.broadcast %c15_i32_74 : i32 to vector<1x256xi32>
    %221 = arith.cmpi sle, %0, %220 : vector<1x256xi32>
    %222 = arith.andi %219, %221 : vector<1x256xi1>
    %c1_i32_75 = arith.constant 1 : i32
    %223 = vector.broadcast %c1_i32_75 : i32 to vector<1x256xi32>
    %224 = arith.cmpi sge, %1, %223 : vector<1x256xi32>
    %225 = arith.andi %222, %224 : vector<1x256xi1>
    %c16_i32_76 = arith.constant 16 : i32
    %226 = vector.broadcast %c16_i32_76 : i32 to vector<1x256xi32>
    %227 = arith.cmpi sle, %1, %226 : vector<1x256xi32>
    %228 = arith.andi %225, %227 : vector<1x256xi1>
    %229 = arith.extui %228 : vector<1x256xi1> to vector<1x256xi32>
    %230 = arith.sitofp %229 : vector<1x256xi32> to vector<1x256xf32>
    %c1_i32_77 = arith.constant 1 : i32
    %231 = tpu.dynamic_rotate %163 by %c1_i32_77 dim 1 : vector<16x256xf32>, i32 -> vector<16x256xf32>
    %232 = vector.broadcast %230 : vector<1x256xf32> to vector<16x256xf32>
    %233 = arith.mulf %231, %232 : vector<16x256xf32>
    %234 = arith.truncf %233 : vector<16x256xf32> to vector<16x256xbf16>
    %c48 = arith.constant 48 : index
    %c0_78 = arith.constant 0 : index
    %235 = vector.load %arg9[%c48, %c0_78] : memref<144x256xbf16, #tpu.memory_space<vmem>>, vector<16x256xbf16>
    tpu.vector_store %arg9[%c48, %c0_78], %234 {strides = array<i32>} : memref<144x256xbf16, #tpu.memory_space<vmem>>, vector<16x256xbf16>,
    %c0_i32_79 = arith.constant 0 : i32
    %236 = vector.broadcast %c0_i32_79 : i32 to vector<1x256xi32>
    %237 = arith.cmpi sge, %0, %236 : vector<1x256xi32>
    %c15_i32_80 = arith.constant 15 : i32
    %238 = vector.broadcast %c15_i32_80 : i32 to vector<1x256xi32>
    %239 = arith.cmpi sle, %0, %238 : vector<1x256xi32>
    %240 = arith.andi %237, %239 : vector<1x256xi1>
    %c0_i32_81 = arith.constant 0 : i32
    %241 = vector.broadcast %c0_i32_81 : i32 to vector<1x256xi32>
    %242 = arith.cmpi sge, %1, %241 : vector<1x256xi32>
    %243 = arith.andi %240, %242 : vector<1x256xi1>
    %c15_i32_82 = arith.constant 15 : i32
    %244 = vector.broadcast %c15_i32_82 : i32 to vector<1x256xi32>
    %245 = arith.cmpi sle, %1, %244 : vector<1x256xi32>
    %246 = arith.andi %243, %245 : vector<1x256xi1>
    %247 = arith.extui %246 : vector<1x256xi1> to vector<1x256xi32>
    %248 = arith.sitofp %247 : vector<1x256xi32> to vector<1x256xf32>
    %249 = vector.broadcast %248 : vector<1x256xf32> to vector<16x256xf32>
    %250 = arith.mulf %163, %249 : vector<16x256xf32>
    %251 = arith.truncf %250 : vector<16x256xf32> to vector<16x256xbf16>
    %c64 = arith.constant 64 : index
    %c0_83 = arith.constant 0 : index
    %252 = vector.load %arg9[%c64, %c0_83] : memref<144x256xbf16, #tpu.memory_space<vmem>>, vector<16x256xbf16>
    tpu.vector_store %arg9[%c64, %c0_83], %251 {strides = array<i32>} : memref<144x256xbf16, #tpu.memory_space<vmem>>, vector<16x256xbf16>,
    %c0_i32_84 = arith.constant 0 : i32
    %253 = vector.broadcast %c0_i32_84 : i32 to vector<1x256xi32>
    %254 = arith.cmpi sge, %0, %253 : vector<1x256xi32>
    %c15_i32_85 = arith.constant 15 : i32
    %255 = vector.broadcast %c15_i32_85 : i32 to vector<1x256xi32>
    %256 = arith.cmpi sle, %0, %255 : vector<1x256xi32>
    %257 = arith.andi %254, %256 : vector<1x256xi1>
    %c-1_i32_86 = arith.constant -1 : i32
    %258 = vector.broadcast %c-1_i32_86 : i32 to vector<1x256xi32>
    %259 = arith.cmpi sge, %1, %258 : vector<1x256xi32>
    %260 = arith.andi %257, %259 : vector<1x256xi1>
    %c14_i32_87 = arith.constant 14 : i32
    %261 = vector.broadcast %c14_i32_87 : i32 to vector<1x256xi32>
    %262 = arith.cmpi sle, %1, %261 : vector<1x256xi32>
    %263 = arith.andi %260, %262 : vector<1x256xi1>
    %264 = arith.extui %263 : vector<1x256xi1> to vector<1x256xi32>
    %265 = arith.sitofp %264 : vector<1x256xi32> to vector<1x256xf32>
    %c255_i32_88 = arith.constant 255 : i32
    %266 = tpu.dynamic_rotate %163 by %c255_i32_88 dim 1 : vector<16x256xf32>, i32 -> vector<16x256xf32>
    %267 = vector.broadcast %265 : vector<1x256xf32> to vector<16x256xf32>
    %268 = arith.mulf %266, %267 : vector<16x256xf32>
    %269 = arith.truncf %268 : vector<16x256xf32> to vector<16x256xbf16>
    %c80 = arith.constant 80 : index
    %c0_89 = arith.constant 0 : index
    %270 = vector.load %arg9[%c80, %c0_89] : memref<144x256xbf16, #tpu.memory_space<vmem>>, vector<16x256xbf16>
    tpu.vector_store %arg9[%c80, %c0_89], %269 {strides = array<i32>} : memref<144x256xbf16, #tpu.memory_space<vmem>>, vector<16x256xbf16>,
    %c-1_i32_90 = arith.constant -1 : i32
    %271 = vector.broadcast %c-1_i32_90 : i32 to vector<1x256xi32>
    %272 = arith.cmpi sge, %0, %271 : vector<1x256xi32>
    %c14_i32_91 = arith.constant 14 : i32
    %273 = vector.broadcast %c14_i32_91 : i32 to vector<1x256xi32>
    %274 = arith.cmpi sle, %0, %273 : vector<1x256xi32>
    %275 = arith.andi %272, %274 : vector<1x256xi1>
    %c1_i32_92 = arith.constant 1 : i32
    %276 = vector.broadcast %c1_i32_92 : i32 to vector<1x256xi32>
    %277 = arith.cmpi sge, %1, %276 : vector<1x256xi32>
    %278 = arith.andi %275, %277 : vector<1x256xi1>
    %c16_i32_93 = arith.constant 16 : i32
    %279 = vector.broadcast %c16_i32_93 : i32 to vector<1x256xi32>
    %280 = arith.cmpi sle, %1, %279 : vector<1x256xi32>
    %281 = arith.andi %278, %280 : vector<1x256xi1>
    %282 = arith.extui %281 : vector<1x256xi1> to vector<1x256xi32>
    %283 = arith.sitofp %282 : vector<1x256xi32> to vector<1x256xf32>
    %c241_i32_94 = arith.constant 241 : i32
    %284 = tpu.dynamic_rotate %163 by %c241_i32_94 dim 1 : vector<16x256xf32>, i32 -> vector<16x256xf32>
    %285 = vector.broadcast %283 : vector<1x256xf32> to vector<16x256xf32>
    %286 = arith.mulf %284, %285 : vector<16x256xf32>
    %287 = arith.truncf %286 : vector<16x256xf32> to vector<16x256xbf16>
    %c96 = arith.constant 96 : index
    %c0_95 = arith.constant 0 : index
    %288 = vector.load %arg9[%c96, %c0_95] : memref<144x256xbf16, #tpu.memory_space<vmem>>, vector<16x256xbf16>
    tpu.vector_store %arg9[%c96, %c0_95], %287 {strides = array<i32>} : memref<144x256xbf16, #tpu.memory_space<vmem>>, vector<16x256xbf16>,
    %c-1_i32_96 = arith.constant -1 : i32
    %289 = vector.broadcast %c-1_i32_96 : i32 to vector<1x256xi32>
    %290 = arith.cmpi sge, %0, %289 : vector<1x256xi32>
    %c14_i32_97 = arith.constant 14 : i32
    %291 = vector.broadcast %c14_i32_97 : i32 to vector<1x256xi32>
    %292 = arith.cmpi sle, %0, %291 : vector<1x256xi32>
    %293 = arith.andi %290, %292 : vector<1x256xi1>
    %c0_i32_98 = arith.constant 0 : i32
    %294 = vector.broadcast %c0_i32_98 : i32 to vector<1x256xi32>
    %295 = arith.cmpi sge, %1, %294 : vector<1x256xi32>
    %296 = arith.andi %293, %295 : vector<1x256xi1>
    %c15_i32_99 = arith.constant 15 : i32
    %297 = vector.broadcast %c15_i32_99 : i32 to vector<1x256xi32>
    %298 = arith.cmpi sle, %1, %297 : vector<1x256xi32>
    %299 = arith.andi %296, %298 : vector<1x256xi1>
    %300 = arith.extui %299 : vector<1x256xi1> to vector<1x256xi32>
    %301 = arith.sitofp %300 : vector<1x256xi32> to vector<1x256xf32>
    %c240_i32_100 = arith.constant 240 : i32
    %302 = tpu.dynamic_rotate %163 by %c240_i32_100 dim 1 : vector<16x256xf32>, i32 -> vector<16x256xf32>
    %303 = vector.broadcast %301 : vector<1x256xf32> to vector<16x256xf32>
    %304 = arith.mulf %302, %303 : vector<16x256xf32>
    %305 = arith.truncf %304 : vector<16x256xf32> to vector<16x256xbf16>
    %c112 = arith.constant 112 : index
    %c0_101 = arith.constant 0 : index
    %306 = vector.load %arg9[%c112, %c0_101] : memref<144x256xbf16, #tpu.memory_space<vmem>>, vector<16x256xbf16>
    tpu.vector_store %arg9[%c112, %c0_101], %305 {strides = array<i32>} : memref<144x256xbf16, #tpu.memory_space<vmem>>, vector<16x256xbf16>,
    %c-1_i32_102 = arith.constant -1 : i32
    %307 = vector.broadcast %c-1_i32_102 : i32 to vector<1x256xi32>
    %308 = arith.cmpi sge, %0, %307 : vector<1x256xi32>
    %c14_i32_103 = arith.constant 14 : i32
    %309 = vector.broadcast %c14_i32_103 : i32 to vector<1x256xi32>
    %310 = arith.cmpi sle, %0, %309 : vector<1x256xi32>
    %311 = arith.andi %308, %310 : vector<1x256xi1>
    %c-1_i32_104 = arith.constant -1 : i32
    %312 = vector.broadcast %c-1_i32_104 : i32 to vector<1x256xi32>
    %313 = arith.cmpi sge, %1, %312 : vector<1x256xi32>
    %314 = arith.andi %311, %313 : vector<1x256xi1>
    %c14_i32_105 = arith.constant 14 : i32
    %315 = vector.broadcast %c14_i32_105 : i32 to vector<1x256xi32>
    %316 = arith.cmpi sle, %1, %315 : vector<1x256xi32>
    %317 = arith.andi %314, %316 : vector<1x256xi1>
    %318 = arith.extui %317 : vector<1x256xi1> to vector<1x256xi32>
    %319 = arith.sitofp %318 : vector<1x256xi32> to vector<1x256xf32>
    %c239_i32_106 = arith.constant 239 : i32
    %320 = tpu.dynamic_rotate %163 by %c239_i32_106 dim 1 : vector<16x256xf32>, i32 -> vector<16x256xf32>
    %321 = vector.broadcast %319 : vector<1x256xf32> to vector<16x256xf32>
    %322 = arith.mulf %320, %321 : vector<16x256xf32>
    %323 = arith.truncf %322 : vector<16x256xf32> to vector<16x256xbf16>
    %c128 = arith.constant 128 : index
    %c0_107 = arith.constant 0 : index
    %324 = vector.load %arg9[%c128, %c0_107] : memref<144x256xbf16, #tpu.memory_space<vmem>>, vector<16x256xbf16>
    tpu.vector_store %arg9[%c128, %c0_107], %323 {strides = array<i32>} : memref<144x256xbf16, #tpu.memory_space<vmem>>, vector<16x256xbf16>,
    %c0_108 = arith.constant 0 : index
    %c0_109 = arith.constant 0 : index
    %325 = vector.load %arg5[%c0_108, %c0_109] : memref<12x144xbf16, #tpu.memory_space<vmem>>, vector<12x144xbf16>
    %c0_110 = arith.constant 0 : index
    %c0_111 = arith.constant 0 : index
    %326 = vector.load %arg9[%c0_110, %c0_111] : memref<144x256xbf16, #tpu.memory_space<vmem>>, vector<144x256xbf16>
    %cst_112 = arith.constant dense<0.000000e+00> : vector<12x256xf32>
    %327 = tpu.matmul %325, %326, %cst_112 {dimension_numbers = #tpu.dot_dimension_numbers<[1], [0], [0], [1], [0, 0, 1, 1], [], []>} : vector<12x144xbf16>, vector<144x256xbf16>, vector<12x256xf32> -> vector<12x256xf32>
    %c0_113 = arith.constant 0 : index
    %c0_114 = arith.constant 0 : index
    %328 = vector.load %arg6[%c0_113, %c0_114] : memref<12x1xf32, #tpu.memory_space<vmem>>, vector<12x1xf32>
    %329 = vector.broadcast %328 : vector<12x1xf32> to vector<12x256xf32>
    %330 = arith.addf %327, %329 : vector<12x256xf32>
    %c0_115 = arith.constant 0 : index
    %c0_116 = arith.constant 0 : index
    %331 = vector.load %arg7[%c0_115, %c0_116] : memref<12x256xf32, #tpu.memory_space<vmem>>, vector<12x256xf32>
    tpu.vector_store %arg7[%c0_115, %c0_116], %330 {strides = array<i32>} : memref<12x256xf32, #tpu.memory_space<vmem>>, vector<12x256xf32>,
    return
  }
  func.func @transform_0(%arg0: i32) -> (i32, i32) {
    %c0_i32 = arith.constant 0 : i32
    %c0_i32_0 = arith.constant 0 : i32
    return %c0_i32, %arg0 : i32, i32
  }
  func.func @transform_1(%arg0: i32) -> (i32, i32) {
    %c0_i32 = arith.constant 0 : i32
    %c0_i32_0 = arith.constant 0 : i32
    return %c0_i32, %arg0 : i32, i32
  }
  func.func @transform_2(%arg0: i32) -> (i32, i32) {
    %c0_i32 = arith.constant 0 : i32
    %c0_i32_0 = arith.constant 0 : i32
    %c0_i32_1 = arith.constant 0 : i32
    return %c0_i32, %c0_i32_0 : i32, i32
  }
  func.func @transform_3(%arg0: i32) -> (i32, i32) {
    %c0_i32 = arith.constant 0 : i32
    %c0_i32_0 = arith.constant 0 : i32
    %c0_i32_1 = arith.constant 0 : i32
    return %c0_i32, %c0_i32_0 : i32, i32
  }
  func.func @transform_4(%arg0: i32) -> (i32, i32) {
    %c0_i32 = arith.constant 0 : i32
    %c0_i32_0 = arith.constant 0 : i32
    %c0_i32_1 = arith.constant 0 : i32
    return %c0_i32, %c0_i32_0 : i32, i32
  }
  func.func @transform_5(%arg0: i32) -> (i32, i32) {
    %c0_i32 = arith.constant 0 : i32
    %c0_i32_0 = arith.constant 0 : i32
    %c0_i32_1 = arith.constant 0 : i32
    return %c0_i32, %c0_i32_0 : i32, i32
  }
  func.func @transform_6(%arg0: i32) -> (i32, i32) {
    %c0_i32 = arith.constant 0 : i32
    %c0_i32_0 = arith.constant 0 : i32
    return %c0_i32, %arg0 : i32, i32
  }
}

</mosaic_0001>

<llo_original>
// kernel: tpu_custom_call.1
$region0: #{tpu_custom_call.1}
  #allocation0 [shape = 'u32[]', space=smem, size = 0x4, offset = 0x4, fixed_abs, tag = 'smem constant byte address 0x4 - core index']
  #allocation1 [shape = 'u32[144,128]{1,0:T(1,128)}', space=vmem, size = 0x12000, scoped, tag = 'internal scratch']
  #allocation2 [shape = 'f32[27,256]{1,0:T(8,128)}', space=vmem, size = 0x8000, scoped, tag = 'scratch operand']
  #allocation3 [shape = 'bf16[144,256]{1,0:T(16,128)(2,1)}', space=vmem, size = 0x12000, scoped, tag = 'scratch operand']
  %s0 = inlined_call_operand.vmem [shape: f32[3,512], index: 0, kind: input, shape index: {}]
  %s1 = inlined_call_operand.hbm [shape: s32[2,512], index: 1, kind: input, shape index: {}]
  %s2 = inlined_call_operand.vmem [shape: bf16[16,27], index: 2, kind: input, shape index: {}]
  %s3 = inlined_call_operand.vmem [shape: f32[16,1], index: 3, kind: input, shape index: {}]
  %s4 = inlined_call_operand.vmem [shape: bf16[12,144], index: 4, kind: input, shape index: {}]
  %s5 = inlined_call_operand.vmem [shape: f32[12,1], index: 5, kind: input, shape index: {}]
  %s6 = inlined_call_operand.hbm [shape: f32[12,512], index: 6, kind: output, shape index: {}]
  %s7 = sld [smem:[#allocation0]]
  $region61: #{tpu_custom_call.1} parent=0
    _
  %s9 = ssub.s32 1, %s7
  %s10 = scalar_select 0, %s9, %s7
  $region1: #{tpu_custom_call.1} parent=0
    #allocation4 [shape = 'u8[4096]{0}', space=vmem, size = 0x1000, scoped, tag = 'input window, operand 1']
    #allocation5 [shape = 's32[2]{0}', space=sflag, size = 0x8, scoped, tag = 'scoped memory for tpu_custom_call.1']
    #allocation6 [shape = 's32[2]{0}', space=sflag, size = 0x8, scoped, tag = 'scoped memory for tpu_custom_call.1']
    #allocation7 [shape = 'u8[32768]{0}', space=vmem, size = 0x8000, scoped, tag = 'output window, operand 0']
    %11 = vsyncpa [#allocation5], 0
    %s12 = scalar_lea.sflag [#allocation5], 1
    %13 = vsyncpa %s12, 0
    %14 = vsyncpa [#allocation6], 0
    %s15 = scalar_lea.sflag [#allocation6], 1
    %16 = vsyncpa %s15, 0
    loop: start=0, step=1, limit=4
    $region2: #{tpu_custom_call.1} parent=1 // loop_pre_header
      _
    $region3: #{tpu_custom_call.1} parent=1 // loop_header
      %s18 = sphi 0, %s22
      %p19 = scmp.ge.s32.totalorder %s18, 4
      %s28 = sphi 0, %s30
      %s31 = sphi 0, %s28
      %s32 = sphi 0, %s31
      %s48 = sphi 0, %s32
      %s54 = sphi 0, %s56
      %s57 = sphi 0, %s54
      %s58 = sphi 0, %s57
      %s74 = sphi 0, %s58
      %s78 = sphi 0, %s78
      %s80 = sphi 0, %s78
      %s81 = sphi 0, %s80
      %s95 = sphi 0, %s81
      %s99 = sphi 0, %s99
      %s101 = sphi 0, %s99
      %s102 = sphi 0, %s101
      %s116 = sphi 0, %s102
      %s120 = sphi 0, %s120
      %s122 = sphi 0, %s120
      %s123 = sphi 0, %s122
      %s137 = sphi 0, %s123
      %s141 = sphi 0, %s141
      %s143 = sphi 0, %s141
      %s144 = sphi 0, %s143
      %s158 = sphi 0, %s144
      %s164 = sphi 0, %s166
      %s167 = sphi 0, %s164
      %s168 = sphi 0, %s167
      %s184 = sphi 0, %s168
    $region4: #{tpu_custom_call.1} parent=1 // loop_header_branch
      %21 = sbr.rel (%p19) target = $region8
    $region5: #{tpu_custom_call.1} parent=1 // loop_body
      %s23 = ssub.s32 %s18, 1
      %s24 = ssub.s32 %s18, 2
      %s25 = sadd.s32 %s18, 1
      %s26 = ssub.s32 %s18, %s25
      %p27 = scmp.eq.s32.totalorder %s26, 0
      %s29 = sadd.s32 %s28, 1
      %s30 = scalar_select %p27, %s28, %s29
      %p33 = pneg %p27
      %p34 = scmp.eq.s32.totalorder %s18, 1
      %p35 = por %p33, %p34
      %p36 = scmp.ne.s32.totalorder %s28, %s31
      %p37 = scmp.eq.s32.totalorder %s18, 0
      %p38 = por %p36, %p37
      %p39 = scmp.ne.s32.totalorder %s28, %s31
      %p40 = scmp.eq.s32.totalorder %s23, 1
      %p41 = por %p39, %p40
      %p42 = scmp.ne.s32.totalorder %s31, %s32
      %p43 = scmp.eq.s32.totalorder %s23, 0
      %p44 = por %p42, %p43
      %p45 = scmp.ne.s32.totalorder %s31, %s32
      %p46 = scmp.eq.s32.totalorder %s24, 1
      %p47 = por %p45, %p46
      %p49 = scmp.ne.s32.totalorder %s32, %s48
      %p50 = scmp.eq.s32.totalorder %s24, 0
      %p51 = por %p49, %p50
      %s52 = ssub.s32 %s18, %s25
      %p53 = scmp.eq.s32.totalorder %s52, 0
      %s55 = sadd.s32 %s54, 1
      %s56 = scalar_select %p53, %s54, %s55
      %p59 = pneg %p53
      %p60 = scmp.eq.s32.totalorder %s18, 1
      %p61 = por %p59, %p60
      %p62 = scmp.ne.s32.totalorder %s54, %s57
      %p63 = scmp.eq.s32.totalorder %s18, 0
      %p64 = por %p62, %p63
      %p65 = scmp.ne.s32.totalorder %s54, %s57
      %p66 = scmp.eq.s32.totalorder %s23, 1
      %p67 = por %p65, %p66
      %p68 = scmp.ne.s32.totalorder %s57, %s58
      %p69 = scmp.eq.s32.totalorder %s23, 0
      %p70 = por %p68, %p69
      %p71 = scmp.ne.s32.totalorder %s57, %s58
      %p72 = scmp.eq.s32.totalorder %s24, 1
      %p73 = por %p71, %p72
      %p75 = scmp.ne.s32.totalorder %s58, %s74
      %p76 = scmp.eq.s32.totalorder %s24, 0
      %p77 = por %p75, %p76
      %s79 = sadd.s32 %s78, 1
      %p82 = scmp.eq.s32.totalorder %s18, 1
      %p83 = scmp.ne.s32.totalorder %s78, %s80
      %p84 = scmp.eq.s32.totalorder %s18, 0
      %p85 = por %p83, %p84
      %p86 = scmp.ne.s32.totalorder %s78, %s80
      %p87 = scmp.eq.s32.totalorder %s23, 1
      %p88 = por %p86, %p87
      %p89 = scmp.ne.s32.totalorder %s80, %s81
      %p90 = scmp.eq.s32.totalorder %s23, 0
      %p91 = por %p89, %p90
      %p92 = scmp.ne.s32.totalorder %s80, %s81
      %p93 = scmp.eq.s32.totalorder %s24, 1
      %p94 = por %p92, %p93
      %p96 = scmp.ne.s32.totalorder %s81, %s95
      %p97 = scmp.eq.s32.totalorder %s24, 0
      %p98 = por %p96, %p97
      %s100 = sadd.s32 %s99, 1
      %p103 = scmp.eq.s32.totalorder %s18, 1
      %p104 = scmp.ne.s32.totalorder %s99, %s101
      %p105 = scmp.eq.s32.totalorder %s18, 0
      %p106 = por %p104, %p105
      %p107 = scmp.ne.s32.totalorder %s99, %s101
      %p108 = scmp.eq.s32.totalorder %s23, 1
      %p109 = por %p107, %p108
      %p110 = scmp.ne.s32.totalorder %s101, %s102
      %p111 = scmp.eq.s32.totalorder %s23, 0
      %p112 = por %p110, %p111
      %p113 = scmp.ne.s32.totalorder %s101, %s102
      %p114 = scmp.eq.s32.totalorder %s24, 1
      %p115 = por %p113, %p114
      %p117 = scmp.ne.s32.totalorder %s102, %s116
      %p118 = scmp.eq.s32.totalorder %s24, 0
      %p119 = por %p117, %p118
      %s121 = sadd.s32 %s120, 1
      %p124 = scmp.eq.s32.totalorder %s18, 1
      %p125 = scmp.ne.s32.totalorder %s120, %s122
      %p126 = scmp.eq.s32.totalorder %s18, 0
      %p127 = por %p125, %p126
      %p128 = scmp.ne.s32.totalorder %s120, %s122
      %p129 = scmp.eq.s32.totalorder %s23, 1
      %p130 = por %p128, %p129
      %p131 = scmp.ne.s32.totalorder %s122, %s123
      %p132 = scmp.eq.s32.totalorder %s23, 0
      %p133 = por %p131, %p132
      %p134 = scmp.ne.s32.totalorder %s122, %s123
      %p135 = scmp.eq.s32.totalorder %s24, 1
      %p136 = por %p134, %p135
      %p138 = scmp.ne.s32.totalorder %s123, %s137
      %p139 = scmp.eq.s32.totalorder %s24, 0
      %p140 = por %p138, %p139
      %s142 = sadd.s32 %s141, 1
      %p145 = scmp.eq.s32.totalorder %s18, 1
      %p146 = scmp.ne.s32.totalorder %s141, %s143
      %p147 = scmp.eq.s32.totalorder %s18, 0
      %p148 = por %p146, %p147
      %p149 = scmp.ne.s32.totalorder %s141, %s143
      %p150 = scmp.eq.s32.totalorder %s23, 1
      %p151 = por %p149, %p150
      %p152 = scmp.ne.s32.totalorder %s143, %s144
      %p153 = scmp.eq.s32.totalorder %s23, 0
      %p154 = por %p152, %p153
      %p155 = scmp.ne.s32.totalorder %s143, %s144
      %p156 = scmp.eq.s32.totalorder %s24, 1
      %p157 = por %p155, %p156
      %p159 = scmp.ne.s32.totalorder %s144, %s158
      %p160 = scmp.eq.s32.totalorder %s24, 0
      %p161 = por %p159, %p160
      %s162 = ssub.s32 %s18, %s25
      %p163 = scmp.eq.s32.totalorder %s162, 0
      %s165 = sadd.s32 %s164, 1
      %s166 = scalar_select %p163, %s164, %s165
      %p169 = pneg %p163
      %p170 = scmp.eq.s32.totalorder %s18, 1
      %p171 = por %p169, %p170
      %p172 = scmp.ne.s32.totalorder %s164, %s167
      %p173 = scmp.eq.s32.totalorder %s18, 0
      %p174 = por %p172, %p173
      %p175 = scmp.ne.s32.totalorder %s164, %s167
      %p176 = scmp.eq.s32.totalorder %s23, 1
      %p177 = por %p175, %p176
      %p178 = scmp.ne.s32.totalorder %s167, %s168
      %p179 = scmp.eq.s32.totalorder %s23, 0
      %p180 = por %p178, %p179
      %p181 = scmp.ne.s32.totalorder %s167, %s168
      %p182 = scmp.eq.s32.totalorder %s24, 1
      %p183 = por %p181, %p182
      %p185 = scmp.ne.s32.totalorder %s168, %s184
      %p186 = scmp.eq.s32.totalorder %s24, 0
      %p187 = por %p185, %p186
      %p188 = scmp.le.s32.totalorder 1, %s18
      %p189 = scmp.lt.s32.totalorder %s18, 3
      %p190 = pnand %p188, %p189
      %p191 = pneg %p190
      // Predicated region
      $region9: #{tpu_custom_call.1} parent=5 // pred_check
        _
      $region10: #{tpu_custom_call.1} parent=5 // pred_check_branch
        %193 = sbr.rel (%p190) target = $region12
      $region11: #{tpu_custom_call.1} parent=5 // pred_region
        %s194 = ssub.s32 %s18, 1
        // Predicated region
        $region13: #{tpu_custom_call.1} parent=11 // pred_check
          %p195 = pneg %p91
        $region14: #{tpu_custom_call.1} parent=11 // pred_check_branch
          %197 = sbr.rel (%p195) target = $region16
        $region15: #{tpu_custom_call.1} parent=11 // pred_region
          _
        $region16: #{tpu_custom_call.1} parent=11 // pred_fallthru
          _
        // Predicated region
        $region17: #{tpu_custom_call.1} parent=11 // pred_check
          %p198 = pneg %p112
        $region18: #{tpu_custom_call.1} parent=11 // pred_check_branch
          %200 = sbr.rel (%p198) target = $region20
        $region19: #{tpu_custom_call.1} parent=11 // pred_region
          _
        $region20: #{tpu_custom_call.1} parent=11 // pred_fallthru
          _
        // Predicated region
        $region21: #{tpu_custom_call.1} parent=11 // pred_check
          %p201 = pneg %p133
        $region22: #{tpu_custom_call.1} parent=11 // pred_check_branch
          %203 = sbr.rel (%p201) target = $region24
        $region23: #{tpu_custom_call.1} parent=11 // pred_region
          _
        $region24: #{tpu_custom_call.1} parent=11 // pred_fallthru
          _
        // Predicated region
        $region25: #{tpu_custom_call.1} parent=11 // pred_check
          %p204 = pneg %p154
        $region26: #{tpu_custom_call.1} parent=11 // pred_check_branch
          %206 = sbr.rel (%p204) target = $region28
        $region27: #{tpu_custom_call.1} parent=11 // pred_region
          _
        $region28: #{tpu_custom_call.1} parent=11 // pred_fallthru
          _
      $region12: #{tpu_custom_call.1} parent=5 // pred_fallthru
        _
      %p207 = scmp.lt.s32.totalorder %s18, 2
      // Predicated region
      $region29: #{tpu_custom_call.1} parent=5 // pred_check
        %p208 = pneg %p207
      $region30: #{tpu_custom_call.1} parent=5 // pred_check_branch
        %210 = sbr.rel (%p208) target = $region32
      $region31: #{tpu_custom_call.1} parent=5 // pred_region
        // Predicated region
        $region33: #{tpu_custom_call.1} parent=31 // pred_check
          %p211 = pneg %p38
        $region34: #{tpu_custom_call.1} parent=31 // pred_check_branch
          %213 = sbr.rel (%p211) target = $region36
        $region35: #{tpu_custom_call.1} parent=31 // pred_region
          %s214 = smul.u32 2, %s18
          %p215 = scmp.lt.s32.totalorder %s214, 3
          %s216 = scalar_select %p215, %s214, 3
          %s217 = smul.addr %s216, 4
          %s218 = scalar_lea.vmem %s0, %s217
          %s219 = smul.u32 2, %s18
        $region36: #{tpu_custom_call.1} parent=31 // pred_fallthru
          _
        // Predicated region
        $region37: #{tpu_custom_call.1} parent=31 // pred_check
          %p220 = pneg %p64
        $region38: #{tpu_custom_call.1} parent=31 // pred_check_branch
          %222 = sbr.rel (%p220) target = $region40
        $region39: #{tpu_custom_call.1} parent=31 // pred_region
          %s223 = sand.u32 %s54, 1
          %s224 = scalar_lea.sflag [#allocation5], %s223
          %s225 = sand.u32 %s54, 1
          %s226 = smul.addr %s225, 4
          %s227 = scalar_lea.vmem [#allocation4], %s226
          %s228 = smul.u32 2, %s18
          %s230 = ssub.s32 64, 64
          %231 = vsyncadd %s224, %s230
          %s232 = smul.addr %s228, 32
          %s233 = scalar_lea.hbm %s1, %s232
          %s235 = sshll.u32 %s227, 4
          %s236 = int_to_ptr.vmem [resolvable:$true] %s235
          %238 = dma.hbm_to_vmem [thread:$0]  %s233, 64, %s236, %s224
        $region40: #{tpu_custom_call.1} parent=31 // pred_fallthru
          _
      $region32: #{tpu_custom_call.1} parent=5 // pred_fallthru
        _
      %p239 = scmp.le.s32.totalorder 1, %s18
      %p240 = scmp.lt.s32.totalorder %s18, 3
      %p241 = pnand %p239, %p240
      %p242 = pneg %p241
      // Predicated region
      $region41: #{tpu_custom_call.1} parent=5 // pred_check
        _
      $region42: #{tpu_custom_call.1} parent=5 // pred_check_branch
        %244 = sbr.rel (%p241) target = $region44
      $region43: #{tpu_custom_call.1} parent=5 // pred_region
        %s245 = ssub.s32 %s18, 1
        %s246 = sand.u32 %s57, 1
        %s247 = scalar_lea.sflag [#allocation5], %s246
        %s248 = sand.u32 %s57, 1
        %s249 = smul.addr %s248, 4
        %s250 = scalar_lea.vmem [#allocation4], %s249
        // Predicated region
        $region45: #{tpu_custom_call.1} parent=43 // pred_check
          %p251 = pneg %p70
        $region46: #{tpu_custom_call.1} parent=43 // pred_check_branch
          %253 = sbr.rel (%p251) target = $region48
        $region47: #{tpu_custom_call.1} parent=43 // pred_region
          %254 = dma.done %s247, 64
        $region48: #{tpu_custom_call.1} parent=43 // pred_fallthru
          _
        %s255 = smul.u32 2, %s23
        %p256 = scmp.lt.s32.totalorder %s255, 3
        %s257 = scalar_select %p256, %s255, 3
        %s258 = smul.addr %s257, 4
        %s259 = scalar_lea.vmem %s0, %s258
        %p260 = pneg %p44
        %p261 = pneg %p41
        %s262 = sand.u32 %s57, 1
        %s263 = scalar_lea.sflag [#allocation5], %s262
        %s264 = sand.u32 %s57, 1
        %s265 = smul.addr %s264, 4
        %s266 = scalar_lea.vmem [#allocation4], %s265
        %p267 = pneg %p70
        %p268 = pneg %p67
        %p269 = pneg %p91
        %p270 = pneg %p88
        %p271 = pneg %p112
        %p272 = pneg %p109
        %p273 = pneg %p133
        %p274 = pneg %p130
        %p275 = pneg %p154
        %p276 = pneg %p151
        %p277 = pneg %p180
        %p278 = pneg %p177
        %s279 = sand.u32 %s167, 1
        %s280 = scalar_lea.sflag [#allocation6], %s279
        %s281 = sand.u32 %s167, 1
        %s282 = smul.addr %s281, 32
        %s283 = scalar_lea.vmem [#allocation7], %s282
        %s284 = smul.u32 2, %s23
        %p285 = scmp.lt.s32.totalorder %s284, 3
        %s286 = scalar_select %p285, %s284, 3
        %s287 = smul.addr %s286, 4
        %s288 = scalar_lea.vmem %s0, %s287
        %s289 = smul.u32 2, %s23
        %s290 = smul.u32 2, %s23
        %s291 = smul.u32 2, %s23
        %v293 = vld [vmem:[%s250] ss:$2 sm:$0x3]
        %s294 = scalar_lea.vmem %s250, 1 [#allocation4]
        %v295 = vld [vmem:[%s294] ss:$2 sm:$0x3]
        %v296 = vld [vmem:[%s288] sm:$0x77]
        %vm297 = vcmp.ge.s32.totalorder %v293, 1
        %vm298 = vcmp.le.s32.totalorder %v293, 16
        %vm299 = vmand %vm297, %vm298
        %vm300 = vcmp.ge.s32.totalorder %v295, 1
        %vm301 = vmand %vm299, %vm300
        %vm302 = vcmp.le.s32.totalorder %v295, 16
        %vm303 = vmand %vm301, %vm302
        %v304 = vsel %vm303, 1, 0
        %v305 = vcvt.s32.f32 %v304
        %v307 = vcombine.high %v296, %v296
        %309 = vrot.lane.b32.xlu0 %v296, 17
        %v310 = vpop.permute.xlu0 %309
        %311 = vrot.lane.b32.xlu0 %v307, 17
        %v312 = vpop.permute.xlu0 %311
        %v313 = vlaneseq
        %v314 = vand.u32 %v313, 127
        %vm315 = vcmp.lt.s32.totalorder %v314, 17
        %v316 = vsel %vm315, %v310, %v312
        %v317 = vsel %vm315, %v312, %v310
        %v319 = vlaneseq
        %v320 = vshrl.u32 %v319, 7
        %v321 = vsub.s32 0, %v320
        %v322 = vrot.slane %v305, %v321
        %v323 = vlaneseq
        %v324 = vshrl.u32 %v323, 7
        %v325 = vsub.s32 1, %v324
        %v326 = vrot.slane %v305, %v325
        %v329 = vmul.f32 %v317, %v322
        %v330 = vmul.f32 %v316, %v326
        %331 = vst [vmem:[#allocation2] sm:$0x7] %v329
        %332 = vst [vmem:[#allocation2 + $0x8] sm:$0x7] %v330
        %vm333 = vcmp.ge.s32.totalorder %v295, 0
        %vm334 = vmand %vm299, %vm333
        %vm335 = vcmp.le.s32.totalorder %v295, 15
        %vm336 = vmand %vm334, %vm335
        %v337 = vsel %vm336, 1, 0
        %v338 = vcvt.s32.f32 %v337
        %339 = vrot.lane.b32.xlu0 %v296, 16
        %v340 = vpop.permute.xlu0 %339
        %341 = vrot.lane.b32.xlu0 %v307, 16
        %v342 = vpop.permute.xlu0 %341
        %vm343 = vcmp.lt.s32.totalorder %v314, 16
        %v344 = vsel %vm343, %v340, %v342
        %v345 = vsel %vm343, %v342, %v340
        %v347 = vlaneseq
        %v348 = vshrl.u32 %v347, 7
        %v349 = vsub.s32 0, %v348
        %v350 = vrot.slane %v338, %v349
        %v351 = vlaneseq
        %v352 = vshrl.u32 %v351, 7
        %v353 = vsub.s32 1, %v352
        %v354 = vrot.slane %v338, %v353
        %v357 = vmul.f32 %v345, %v350
        %v358 = vmul.f32 %v344, %v354
        %v361 = vrot.slane %v357, 5
        %v362 = vrot.slane %v358, 5
        %365 = vst [vmem:[#allocation2] sm:$0x38] %v361
        %366 = vst [vmem:[#allocation2 + $0x8] sm:$0x38] %v362
        %vm367 = vcmp.ge.s32.totalorder %v295, 4294967295
        %vm368 = vmand %vm299, %vm367
        %vm369 = vcmp.le.s32.totalorder %v295, 14
        %vm370 = vmand %vm368, %vm369
        %v371 = vsel %vm370, 1, 0
        %v372 = vcvt.s32.f32 %v371
        %373 = vrot.lane.b32.xlu0 %v296, 15
        %v374 = vpop.permute.xlu0 %373
        %375 = vrot.lane.b32.xlu0 %v307, 15
        %v376 = vpop.permute.xlu0 %375
        %vm377 = vcmp.lt.s32.totalorder %v314, 15
        %v378 = vsel %vm377, %v374, %v376
        %v379 = vsel %vm377, %v376, %v374
        %v381 = vlaneseq
        %v382 = vshrl.u32 %v381, 7
        %v383 = vsub.s32 0, %v382
        %v384 = vrot.slane %v372, %v383
        %v385 = vlaneseq
        %v386 = vshrl.u32 %v385, 7
        %v387 = vsub.s32 1, %v386
        %v388 = vrot.slane %v372, %v387
        %v391 = vmul.f32 %v379, %v384
        %v392 = vmul.f32 %v378, %v388
        %v395 = vrot.slane %v391, 2
        %v396 = vrot.slane %v392, 2
        %399 = vst [vmem:[#allocation2] sm:$0xc0] %v395
        %400 = vst [vmem:[#allocation2 + $0x8] sm:$0xc0] %v396
        %401 = vst [vmem:[#allocation2 + $0x10] sm:$0x1] %v395
        %402 = vst [vmem:[#allocation2 + $0x18] sm:$0x1] %v396
        %vm403 = vcmp.ge.s32.totalorder %v293, 0
        %vm404 = vcmp.le.s32.totalorder %v293, 15
        %vm405 = vmand %vm403, %vm404
        %vm406 = vmand %vm405, %vm300
        %vm407 = vmand %vm406, %vm302
        %v408 = vsel %vm407, 1, 0
        %v409 = vcvt.s32.f32 %v408
        %410 = vrot.lane.b32.xlu0 %v296, 1
        %v411 = vpop.permute.xlu0 %410
        %412 = vrot.lane.b32.xlu0 %v307, 1
        %v413 = vpop.permute.xlu0 %412
        %vm414 = vcmp.lt.s32.totalorder %v314, 1
        %v415 = vsel %vm414, %v411, %v413
        %v416 = vsel %vm414, %v413, %v411
        %v418 = vlaneseq
        %v419 = vshrl.u32 %v418, 7
        %v420 = vsub.s32 0, %v419
        %v421 = vrot.slane %v409, %v420
        %v422 = vlaneseq
        %v423 = vshrl.u32 %v422, 7
        %v424 = vsub.s32 1, %v423
        %v425 = vrot.slane %v409, %v424
        %v428 = vmul.f32 %v416, %v421
        %v429 = vmul.f32 %v415, %v425
        %v432 = vrot.slane %v428, 7
        %v433 = vrot.slane %v429, 7
        %436 = vst [vmem:[#allocation2 + $0x10] sm:$0xe] %v432
        %437 = vst [vmem:[#allocation2 + $0x18] sm:$0xe] %v433
        %vm438 = vmand %vm405, %vm333
        %vm439 = vmand %vm438, %vm335
        %v440 = vsel %vm439, 1, 0
        %v441 = vcvt.s32.f32 %v440
        %v443 = vlaneseq
        %v444 = vshrl.u32 %v443, 7
        %v445 = vsub.s32 0, %v444
        %v446 = vrot.slane %v441, %v445
        %v447 = vlaneseq
        %v448 = vshrl.u32 %v447, 7
        %v449 = vsub.s32 1, %v448
        %v450 = vrot.slane %v441, %v449
        %v451 = vcombine.low %v446, %v450
        %v453 = vmul.f32 %v296, %v451
        %v455 = vcombine.low %v453, %v453
        %457 = vst [vmem:[#allocation2 + $0x10] sm:$0x70] %v455
        %458 = vst [vmem:[#allocation2 + $0x18] sm:$0x70] %v453
        %vm459 = vmand %vm405, %vm367
        %vm460 = vmand %vm459, %vm369
        %v461 = vsel %vm460, 1, 0
        %v462 = vcvt.s32.f32 %v461
        %463 = vrot.lane.b32.xlu0 %v296, 127
        %v464 = vpop.permute.xlu0 %463
        %465 = vrot.lane.b32.xlu0 %v307, 127
        %v466 = vpop.permute.xlu0 %465
        %vm467 = vcmp.lt.s32.totalorder %v314, 127
        %v468 = vsel %vm467, %v464, %v466
        %v469 = vsel %vm467, %v466, %v464
        %v471 = vlaneseq
        %v472 = vshrl.u32 %v471, 7
        %v473 = vsub.s32 0, %v472
        %v474 = vrot.slane %v462, %v473
        %v475 = vlaneseq
        %v476 = vshrl.u32 %v475, 7
        %v477 = vsub.s32 1, %v476
        %v478 = vrot.slane %v462, %v477
        %v481 = vmul.f32 %v468, %v474
        %v482 = vmul.f32 %v469, %v478
        %v485 = vrot.slane %v481, 1
        %v486 = vrot.slane %v482, 1
        %489 = vst [vmem:[#allocation2 + $0x10] sm:$0x80] %v485
        %490 = vst [vmem:[#allocation2 + $0x18] sm:$0x80] %v486
        %491 = vst [vmem:[#allocation2 + $0x20] sm:$0x3] %v485
        %492 = vst [vmem:[#allocation2 + $0x28] sm:$0x3] %v486
        %vm493 = vcmp.ge.s32.totalorder %v293, 4294967295
        %vm494 = vcmp.le.s32.totalorder %v293, 14
        %vm495 = vmand %vm493, %vm494
        %vm496 = vmand %vm495, %vm300
        %vm497 = vmand %vm496, %vm302
        %v498 = vsel %vm497, 1, 0
        %v499 = vcvt.s32.f32 %v498
        %500 = vrot.lane.b32.xlu0 %v296, 113
        %v501 = vpop.permute.xlu0 %500
        %502 = vrot.lane.b32.xlu0 %v307, 113
        %v503 = vpop.permute.xlu0 %502
        %vm504 = vcmp.lt.s32.totalorder %v314, 113
        %v505 = vsel %vm504, %v501, %v503
        %v506 = vsel %vm504, %v503, %v501
        %v508 = vlaneseq
        %v509 = vshrl.u32 %v508, 7
        %v510 = vsub.s32 0, %v509
        %v511 = vrot.slane %v499, %v510
        %v512 = vlaneseq
        %v513 = vshrl.u32 %v512, 7
        %v514 = vsub.s32 1, %v513
        %v515 = vrot.slane %v499, %v514
        %v518 = vmul.f32 %v505, %v511
        %v519 = vmul.f32 %v506, %v515
        %v522 = vrot.slane %v518, 6
        %v523 = vrot.slane %v519, 6
        %526 = vst [vmem:[#allocation2 + $0x20] sm:$0x1c] %v522
        %527 = vst [vmem:[#allocation2 + $0x28] sm:$0x1c] %v523
        %vm528 = vmand %vm495, %vm333
        %vm529 = vmand %vm528, %vm335
        %v530 = vsel %vm529, 1, 0
        %v531 = vcvt.s32.f32 %v530
        %532 = vrot.lane.b32.xlu0 %v296, 112
        %v533 = vpop.permute.xlu0 %532
        %534 = vrot.lane.b32.xlu0 %v307, 112
        %v535 = vpop.permute.xlu0 %534
        %vm536 = vcmp.lt.s32.totalorder %v314, 112
        %v537 = vsel %vm536, %v533, %v535
        %v538 = vsel %vm536, %v535, %v533
        %v540 = vlaneseq
        %v541 = vshrl.u32 %v540, 7
        %v542 = vsub.s32 0, %v541
        %v543 = vrot.slane %v531, %v542
        %v544 = vlaneseq
        %v545 = vshrl.u32 %v544, 7
        %v546 = vsub.s32 1, %v545
        %v547 = vrot.slane %v531, %v546
        %v550 = vmul.f32 %v537, %v543
        %v551 = vmul.f32 %v538, %v547
        %v554 = vrot.slane %v550, 3
        %v555 = vrot.slane %v551, 3
        %558 = vst [vmem:[#allocation2 + $0x20] sm:$0xe0] %v554
        %559 = vst [vmem:[#allocation2 + $0x28] sm:$0xe0] %v555
        %vm560 = vmand %vm495, %vm367
        %vm561 = vmand %vm560, %vm369
        %v562 = vsel %vm561, 1, 0
        %v563 = vcvt.s32.f32 %v562
        %564 = vrot.lane.b32.xlu0 %v296, 111
        %v565 = vpop.permute.xlu0 %564
        %566 = vrot.lane.b32.xlu0 %v307, 111
        %v567 = vpop.permute.xlu0 %566
        %vm568 = vcmp.lt.s32.totalorder %v314, 111
        %v569 = vsel %vm568, %v565, %v567
        %v570 = vsel %vm568, %v567, %v565
        %v572 = vlaneseq
        %v573 = vshrl.u32 %v572, 7
        %v574 = vsub.s32 0, %v573
        %v575 = vrot.slane %v563, %v574
        %v576 = vlaneseq
        %v577 = vshrl.u32 %v576, 7
        %v578 = vsub.s32 1, %v577
        %v579 = vrot.slane %v563, %v578
        %v582 = vmul.f32 %v569, %v575
        %v583 = vmul.f32 %v570, %v579
        %584 = vst [vmem:[#allocation2 + $0x30] sm:$0x7] %v582
        %585 = vst [vmem:[#allocation2 + $0x38] sm:$0x7] %v583
        %v586 = vld [vmem:[%s2] sm:$0xf]
        %v587 = vld [vmem:[%s2 + $0x4] sm:$0xf]
        %v588 = vld [vmem:[#allocation2] sm:$0xff]
        %v589 = vld [vmem:[#allocation2 + $0x8] sm:$0xff]
        %v590 = vld [vmem:[#allocation2 + $0x10] sm:$0xff]
        %v591 = vld [vmem:[#allocation2 + $0x18] sm:$0xff]
        %v592 = vld [vmem:[#allocation2 + $0x20] sm:$0xff]
        %v593 = vld [vmem:[#allocation2 + $0x28] sm:$0xff]
        %v594 = vld [vmem:[#allocation2 + $0x30] sm:$0x7]
        %v595 = vld [vmem:[#allocation2 + $0x38] sm:$0x7]
        %v596 = vpack.c.bf16 %v590, %v588
        %v597 = vpack.c.bf16 %v591, %v589
        %v598 = vpack.c.bf16 %v594, %v592
        %v599 = vpack.c.bf16 %v595, %v593
        %v600 = vld [vmem:[%s3] sm:$0xff]
        %v601 = vld [vmem:[%s3 + $0x8] sm:$0xff]
        %603 = vset.pattern.permute.xlu0 0
        %604 = vperm.xlu0 %603, %v600
        %v605 = vpop.permute.xlu0 %604
        %608 = vset.pattern.permute.xlu0 0
        %609 = vperm.xlu0 %608, %v601
        %v610 = vpop.permute.xlu0 %609
        %v614 = vunpack.c.l.b16 %v586
        %v615 = vunpack.c.l.b16 %v587
        %v616 = vpack.c.b16 %v615, %v614
        %vm617 = vcmask 220160
        %v619 = vsel %vm617, %v616, 0
        %vm621 = vcmask 1044480
        %vm622 = vcmask 1045504
        %v623 = vsel %vm621, 4294967295, 65535
        %v624 = vsel %vm622, %v623, 0
        %v626 = vand.u32 %v598, %v624
        %v629 = vand.u32 %v599, %v624
        %631 = vmatprep.subr.bf16.mxu0 %v597
        %632 = vmatpush1.bf16.msra.mxu0 %v596
        %633 = vmatprep.subr.bf16.mxu0 %v629
        %634 = vmatpush1.bf16.msra.mxu0 %v626
        %635 = vmatprep.subr.bf16.mxu0 0
        %636 = vmatpush1.bf16.msra.mxu0 0
        %637 = vmatprep.subr.bf16.mxu0 0
        %638 = vmatpush1.bf16.msra.mxu0 0
        %639 = vmatprep.subr.bf16.mxu0 0
        %640 = vmatpush1.bf16.msra.mxu0 0
        %641 = vmatprep.subr.bf16.mxu0 0
        %642 = vmatpush1.bf16.msra.mxu0 0
        %643 = vmatprep.subr.bf16.mxu0 0
        %644 = vmatpush1.bf16.msra.mxu0 0
        %645 = vmatprep.subr.bf16.mxu0 0
        %646 = vmatpush1.bf16.msra.mxu0 0
        %647 = vmatprep.subr.bf16.mxu0 0
        %648 = vmatpush1.bf16.msra.mxu0 0
        %649 = vmatprep.subr.bf16.mxu0 0
        %650 = vmatpush1.bf16.msra.mxu0 0
        %651 = vmatprep.subr.bf16.mxu0 0
        %652 = vmatpush1.bf16.msra.mxu0 0
        %653 = vmatprep.subr.bf16.mxu0 0
        %654 = vmatpush1.bf16.msra.mxu0 0
        %655 = vmatprep.subr.bf16.mxu0 0
        %656 = vmatpush1.bf16.msra.mxu0 0
        %657 = vmatprep.subr.bf16.mxu0 0
        %658 = vmatpush1.bf16.msra.mxu0 0
        %659 = vmatprep.subr.bf16.mxu0 0
        %660 = vmatpush1.bf16.msra.mxu0 0
        %661 = vmatprep.subr.bf16.mxu0 0
        %662 = vmatpush1.bf16.msra.mxu0 0
        %663 = vmatprep.mubr.bf16.mxu0 0
        %664 = vmatmul.mubr.bf16.gmra.mrb[0].mxu0 %v619
        %v665 = vpop.f32.mrb[0].mxu0
        %v666 = vadd.f32 %v605, %v665
        %v667 = vpop.f32.mrb[0].mxu0
        %v668 = vadd.f32 %v605, %v667
        %v669 = vpop.f32.mrb[0].mxu0
        %v670 = vadd.f32 %v610, %v669
        %v671 = vpop.f32.mrb[0].mxu0
        %v672 = vadd.f32 %v610, %v671
        %673 = vdwg.mxu0
        %v674 = vmax.f32 %v666, 0.0
        %v675 = vmax.f32 %v668, 0.0
        %v676 = vmax.f32 %v670, 0.0
        %v677 = vmax.f32 %v672, 0.0
        %678 = vrot.lane.b32.xlu0 %v674, 17
        %v679 = vpop.permute.xlu0 %678
        %680 = vrot.lane.b32.xlu0 %v676, 17
        %v681 = vpop.permute.xlu0 %680
        %682 = vrot.lane.b32.xlu0 %v675, 17
        %v683 = vpop.permute.xlu0 %682
        %684 = vrot.lane.b32.xlu0 %v677, 17
        %v685 = vpop.permute.xlu0 %684
        %v686 = vsel %vm315, %v679, %v683
        %v687 = vsel %vm315, %v681, %v685
        %v688 = vsel %vm315, %v683, %v679
        %v689 = vsel %vm315, %v685, %v681
        %v690 = vmul.f32 %v688, %v322
        %v691 = vmul.f32 %v686, %v326
        %v692 = vmul.f32 %v689, %v322
        %v693 = vmul.f32 %v687, %v326
        %v694 = vpack.c.bf16 %v692, %v690
        %v695 = vpack.c.bf16 %v693, %v691
        %696 = vst [vmem:[#allocation3] sm:$0xff] %v694
        %697 = vst [vmem:[#allocation3 + $0x8] sm:$0xff] %v695
        %698 = vrot.lane.b32.xlu0 %v674, 16
        %v699 = vpop.permute.xlu0 %698
        %700 = vrot.lane.b32.xlu0 %v676, 16
        %v701 = vpop.permute.xlu0 %700
        %702 = vrot.lane.b32.xlu0 %v675, 16
        %v703 = vpop.permute.xlu0 %702
        %704 = vrot.lane.b32.xlu0 %v677, 16
        %v705 = vpop.permute.xlu0 %704
        %v706 = vsel %vm343, %v699, %v703
        %v707 = vsel %vm343, %v701, %v705
        %v708 = vsel %vm343, %v703, %v699
        %v709 = vsel %vm343, %v705, %v701
        %v710 = vmul.f32 %v708, %v350
        %v711 = vmul.f32 %v706, %v354
        %v712 = vmul.f32 %v709, %v350
        %v713 = vmul.f32 %v707, %v354
        %v714 = vpack.c.bf16 %v712, %v710
        %v715 = vpack.c.bf16 %v713, %v711
        %716 = vst [vmem:[#allocation3 + $0x10] sm:$0xff] %v714
        %717 = vst [vmem:[#allocation3 + $0x18] sm:$0xff] %v715
        %718 = vrot.lane.b32.xlu0 %v674, 15
        %v719 = vpop.permute.xlu0 %718
        %720 = vrot.lane.b32.xlu0 %v676, 15
        %v721 = vpop.permute.xlu0 %720
        %722 = vrot.lane.b32.xlu0 %v675, 15
        %v723 = vpop.permute.xlu0 %722
        %724 = vrot.lane.b32.xlu0 %v677, 15
        %v725 = vpop.permute.xlu0 %724
        %v726 = vsel %vm377, %v719, %v723
        %v727 = vsel %vm377, %v721, %v725
        %v728 = vsel %vm377, %v723, %v719
        %v729 = vsel %vm377, %v725, %v721
        %v730 = vmul.f32 %v728, %v384
        %v731 = vmul.f32 %v726, %v388
        %v732 = vmul.f32 %v729, %v384
        %v733 = vmul.f32 %v727, %v388
        %v734 = vpack.c.bf16 %v732, %v730
        %v735 = vpack.c.bf16 %v733, %v731
        %736 = vst [vmem:[#allocation3 + $0x20] sm:$0xff] %v734
        %737 = vst [vmem:[#allocation3 + $0x28] sm:$0xff] %v735
        %738 = vrot.lane.b32.xlu0 %v674, 1
        %v739 = vpop.permute.xlu0 %738
        %740 = vrot.lane.b32.xlu0 %v676, 1
        %v741 = vpop.permute.xlu0 %740
        %742 = vrot.lane.b32.xlu0 %v675, 1
        %v743 = vpop.permute.xlu0 %742
        %744 = vrot.lane.b32.xlu0 %v677, 1
        %v745 = vpop.permute.xlu0 %744
        %v746 = vsel %vm414, %v739, %v743
        %v747 = vsel %vm414, %v741, %v745
        %v748 = vsel %vm414, %v743, %v739
        %v749 = vsel %vm414, %v745, %v741
        %v750 = vmul.f32 %v748, %v421
        %v751 = vmul.f32 %v746, %v425
        %v752 = vmul.f32 %v749, %v421
        %v753 = vmul.f32 %v747, %v425
        %v754 = vpack.c.bf16 %v752, %v750
        %v755 = vpack.c.bf16 %v753, %v751
        %756 = vst [vmem:[#allocation3 + $0x30] sm:$0xff] %v754
        %757 = vst [vmem:[#allocation3 + $0x38] sm:$0xff] %v755
        %v760 = vmul.f32 %v674, %v446
        %v761 = vmul.f32 %v675, %v450
        %v762 = vmul.f32 %v676, %v446
        %v763 = vmul.f32 %v677, %v450
        %v764 = vpack.c.bf16 %v762, %v760
        %v765 = vpack.c.bf16 %v763, %v761
        %766 = vst [vmem:[#allocation3 + $0x40] sm:$0xff] %v764
        %767 = vst [vmem:[#allocation3 + $0x48] sm:$0xff] %v765
        %768 = vrot.lane.b32.xlu0 %v674, 127
        %v769 = vpop.permute.xlu0 %768
        %770 = vrot.lane.b32.xlu0 %v676, 127
        %v771 = vpop.permute.xlu0 %770
        %772 = vrot.lane.b32.xlu0 %v675, 127
        %v773 = vpop.permute.xlu0 %772
        %774 = vrot.lane.b32.xlu0 %v677, 127
        %v775 = vpop.permute.xlu0 %774
        %v776 = vsel %vm467, %v769, %v773
        %v777 = vsel %vm467, %v771, %v775
        %v778 = vsel %vm467, %v773, %v769
        %v779 = vsel %vm467, %v775, %v771
        %v780 = vmul.f32 %v776, %v474
        %v781 = vmul.f32 %v778, %v478
        %v782 = vmul.f32 %v777, %v474
        %v783 = vmul.f32 %v779, %v478
        %v784 = vpack.c.bf16 %v782, %v780
        %v785 = vpack.c.bf16 %v783, %v781
        %786 = vst [vmem:[#allocation3 + $0x50] sm:$0xff] %v784
        %787 = vst [vmem:[#allocation3 + $0x58] sm:$0xff] %v785
        %788 = vrot.lane.b32.xlu0 %v674, 113
        %v789 = vpop.permute.xlu0 %788
        %790 = vrot.lane.b32.xlu0 %v676, 113
        %v791 = vpop.permute.xlu0 %790
        %792 = vrot.lane.b32.xlu0 %v675, 113
        %v793 = vpop.permute.xlu0 %792
        %794 = vrot.lane.b32.xlu0 %v677, 113
        %v795 = vpop.permute.xlu0 %794
        %v796 = vsel %vm504, %v789, %v793
        %v797 = vsel %vm504, %v791, %v795
        %v798 = vsel %vm504, %v793, %v789
        %v799 = vsel %vm504, %v795, %v791
        %v800 = vmul.f32 %v796, %v511
        %v801 = vmul.f32 %v798, %v515
        %v802 = vmul.f32 %v797, %v511
        %v803 = vmul.f32 %v799, %v515
        %v804 = vpack.c.bf16 %v802, %v800
        %v805 = vpack.c.bf16 %v803, %v801
        %806 = vst [vmem:[#allocation3 + $0x60] sm:$0xff] %v804
        %807 = vst [vmem:[#allocation3 + $0x68] sm:$0xff] %v805
        %808 = vrot.lane.b32.xlu0 %v674, 112
        %v809 = vpop.permute.xlu0 %808
        %810 = vrot.lane.b32.xlu0 %v676, 112
        %v811 = vpop.permute.xlu0 %810
        %812 = vrot.lane.b32.xlu0 %v675, 112
        %v813 = vpop.permute.xlu0 %812
        %814 = vrot.lane.b32.xlu0 %v677, 112
        %v815 = vpop.permute.xlu0 %814
        %v816 = vsel %vm536, %v809, %v813
        %v817 = vsel %vm536, %v811, %v815
        %v818 = vsel %vm536, %v813, %v809
        %v819 = vsel %vm536, %v815, %v811
        %v820 = vmul.f32 %v816, %v543
        %v821 = vmul.f32 %v818, %v547
        %v822 = vmul.f32 %v817, %v543
        %v823 = vmul.f32 %v819, %v547
        %v824 = vpack.c.bf16 %v822, %v820
        %v825 = vpack.c.bf16 %v823, %v821
        %826 = vst [vmem:[#allocation3 + $0x70] sm:$0xff] %v824
        %827 = vst [vmem:[#allocation3 + $0x78] sm:$0xff] %v825
        %828 = vrot.lane.b32.xlu0 %v674, 111
        %v829 = vpop.permute.xlu0 %828
        %830 = vrot.lane.b32.xlu0 %v676, 111
        %v831 = vpop.permute.xlu0 %830
        %832 = vrot.lane.b32.xlu0 %v675, 111
        %v833 = vpop.permute.xlu0 %832
        %834 = vrot.lane.b32.xlu0 %v677, 111
        %v835 = vpop.permute.xlu0 %834
        %v836 = vsel %vm568, %v829, %v833
        %v837 = vsel %vm568, %v831, %v835
        %v838 = vsel %vm568, %v833, %v829
        %v839 = vsel %vm568, %v835, %v831
        %v840 = vmul.f32 %v836, %v575
        %v841 = vmul.f32 %v838, %v579
        %v842 = vmul.f32 %v837, %v575
        %v843 = vmul.f32 %v839, %v579
        %v844 = vpack.c.bf16 %v842, %v840
        %v845 = vpack.c.bf16 %v843, %v841
        %846 = vst [vmem:[#allocation3 + $0x80] sm:$0xff] %v844
        %847 = vst [vmem:[#allocation3 + $0x88] sm:$0xff] %v845
        %v848 = vld [vmem:[%s4] sm:$0xff]
        %v849 = vld [vmem:[%s4 + $0x8] sm:$0x33]
        %v850 = vld [vmem:[#allocation3] sm:$0xff]
        %v851 = vld [vmem:[#allocation3 + $0x8] sm:$0xff]
        %v852 = vld [vmem:[#allocation3 + $0x10] sm:$0xff]
        %v853 = vld [vmem:[#allocation3 + $0x18] sm:$0xff]
        %v854 = vld [vmem:[#allocation3 + $0x20] sm:$0xff]
        %v855 = vld [vmem:[#allocation3 + $0x28] sm:$0xff]
        %v856 = vld [vmem:[#allocation3 + $0x30] sm:$0xff]
        %v857 = vld [vmem:[#allocation3 + $0x38] sm:$0xff]
        %v858 = vld [vmem:[#allocation3 + $0x40] sm:$0xff]
        %v859 = vld [vmem:[#allocation3 + $0x48] sm:$0xff]
        %v860 = vld [vmem:[#allocation3 + $0x50] sm:$0xff]
        %v861 = vld [vmem:[#allocation3 + $0x58] sm:$0xff]
        %v862 = vld [vmem:[#allocation3 + $0x60] sm:$0xff]
        %v863 = vld [vmem:[#allocation3 + $0x68] sm:$0xff]
        %v864 = vld [vmem:[#allocation3 + $0x70] sm:$0xff]
        %v865 = vld [vmem:[#allocation3 + $0x78] sm:$0xff]
        %v866 = vld [vmem:[#allocation3 + $0x80] sm:$0xff]
        %v867 = vld [vmem:[#allocation3 + $0x88] sm:$0xff]
        %v868 = vld [vmem:[%s5] sm:$0xff]
        %v869 = vld [vmem:[%s5 + $0x8] sm:$0xf]
        %871 = vset.pattern.permute.xlu0 0
        %872 = vperm.xlu0 %871, %v868
        %v873 = vpop.permute.xlu0 %872
        %876 = vset.pattern.permute.xlu0 0
        %877 = vperm.xlu0 %876, %v869
        %v878 = vpop.permute.xlu0 %877
        %v882 = vunpack.c.l.b16 %v848
        %v883 = vunpack.c.h.b16 %v848
        %v884 = vunpack.c.l.b16 %v849
        %v885 = vunpack.c.h.b16 %v849
        %v886 = vpack.c.b16 %v884, %v882
        %v887 = vpack.c.b16 %v885, %v883
        %vm889 = vcmask 130048
        %v891 = vsel %vm889, %v887, 0
        %893 = vmatprep.subr.bf16.mxu0 %v851
        %894 = vmatpush1.bf16.msra.mxu0 %v850
        %895 = vmatprep.subr.bf16.mxu0 %v853
        %896 = vmatpush1.bf16.msra.mxu0 %v852
        %897 = vmatprep.subr.bf16.mxu0 %v855
        %898 = vmatpush1.bf16.msra.mxu0 %v854
        %899 = vmatprep.subr.bf16.mxu0 %v857
        %900 = vmatpush1.bf16.msra.mxu0 %v856
        %901 = vmatprep.subr.bf16.mxu0 %v859
        %902 = vmatpush1.bf16.msra.mxu0 %v858
        %903 = vmatprep.subr.bf16.mxu0 %v861
        %904 = vmatpush1.bf16.msra.mxu0 %v860
        %905 = vmatprep.subr.bf16.mxu0 %v863
        %906 = vmatpush1.bf16.msra.mxu0 %v862
        %907 = vmatprep.subr.bf16.mxu0 %v865
        %908 = vmatpush1.bf16.msra.mxu0 %v864
        %909 = vmatprep.subr.bf16.mxu0 %v867
        %910 = vmatpush1.bf16.msra.mxu0 %v866
        %911 = vmatprep.subr.bf16.mxu0 0
        %912 = vmatpush1.bf16.msra.mxu0 0
        %913 = vmatprep.subr.bf16.mxu0 0
        %914 = vmatpush1.bf16.msra.mxu0 0
        %915 = vmatprep.subr.bf16.mxu0 0
        %916 = vmatpush1.bf16.msra.mxu0 0
        %917 = vmatprep.subr.bf16.mxu0 0
        %918 = vmatpush1.bf16.msra.mxu0 0
        %919 = vmatprep.subr.bf16.mxu0 0
        %920 = vmatpush1.bf16.msra.mxu0 0
        %921 = vmatprep.subr.bf16.mxu0 0
        %922 = vmatpush1.bf16.msra.mxu0 0
        %923 = vmatprep.subr.bf16.mxu0 0
        %924 = vmatpush1.bf16.msra.mxu0 0
        %925 = vmatprep.mubr.bf16.mxu0 %v891
        %926 = vmatmul.mubr.bf16.gmra.mrb[0].mxu0 %v886
        %v927 = vpop.f32.mrb[0].mxu0
        %v928 = vadd.f32 %v873, %v927
        %v929 = vpop.f32.mrb[0].mxu0
        %v930 = vadd.f32 %v873, %v929
        %v931 = vpop.f32.mrb[0].mxu0
        %v932 = vadd.f32 %v878, %v931
        %v933 = vpop.f32.mrb[0].mxu0
        %v934 = vadd.f32 %v878, %v933
        %935 = vdwg.mxu0
        %936 = vst [vmem:[%s283] sm:$0xff] %v928
        %937 = vst [vmem:[%s283 + $0x8] sm:$0xff] %v930
        %938 = vst [vmem:[%s283 + $0x10] sm:$0xf] %v932
        %939 = vst [vmem:[%s283 + $0x18] sm:$0xf] %v934
        %s940 = sand.u32 %s167, 1
        %s941 = scalar_lea.sflag [#allocation6], %s940
        %s942 = sand.u32 %s167, 1
        %s943 = smul.addr %s942, 32
        %s944 = scalar_lea.vmem [#allocation7], %s943
        // Predicated region
        $region49: #{tpu_custom_call.1} parent=43 // pred_check
          %p945 = pneg %p177
        $region50: #{tpu_custom_call.1} parent=43 // pred_check_branch
          %947 = sbr.rel (%p945) target = $region52
        $region51: #{tpu_custom_call.1} parent=43 // pred_region
          %s948 = smul.u32 2, %s23
          %s950 = ssub.s32 512, 512
          %951 = vsyncadd %s941, %s950
          %s952 = smul.addr %s948, 128
          %s953 = scalar_lea.hbm %s6, %s952
          %s954 = sshll.u32 %s944, 4
          %s955 = int_to_ptr.vmem [resolvable:$true] %s954
          %960 = dma.vmem_to_hbm [thread:$0]  %s955, 512, %s953, %s941, 256, 512, 16
        $region52: #{tpu_custom_call.1} parent=43 // pred_fallthru
          _
      $region44: #{tpu_custom_call.1} parent=5 // pred_fallthru
        _
      %p961 = scmp.le.s32.totalorder 2, %s18
      // Predicated region
      $region53: #{tpu_custom_call.1} parent=5 // pred_check
        %p962 = pneg %p961
      $region54: #{tpu_custom_call.1} parent=5 // pred_check_branch
        %964 = sbr.rel (%p962) target = $region56
      $region55: #{tpu_custom_call.1} parent=5 // pred_region
        %s965 = ssub.s32 %s18, 2
        // Predicated region
        $region57: #{tpu_custom_call.1} parent=55 // pred_check
          %p966 = pneg %p183
        $region58: #{tpu_custom_call.1} parent=55 // pred_check_branch
          %968 = sbr.rel (%p966) target = $region60
        $region59: #{tpu_custom_call.1} parent=55 // pred_region
          %s969 = sand.u32 %s168, 1
          %s970 = scalar_lea.sflag [#allocation6], %s969
          %s971 = sand.u32 %s168, 1
          %s972 = smul.addr %s971, 32
          %s973 = scalar_lea.vmem [#allocation7], %s972
          %974 = dma.done %s970, 512
        $region60: #{tpu_custom_call.1} parent=55 // pred_fallthru
          _
      $region56: #{tpu_custom_call.1} parent=5 // pred_fallthru
        _
    $region6: #{tpu_custom_call.1} parent=1 // loop_footer
      %s22 = sadd.s32 1, %s18
    $region7: #{tpu_custom_call.1} parent=1 // loop_footer_branch
      %17 = sbr.rel target = $region3
    $region8: #{tpu_custom_call.1} parent=1 // loop_exit
      _
    %975 = vsyncpa [#allocation5], 1
    %s976 = scalar_lea.sflag [#allocation5], 1
    %977 = vsyncpa %s976, 1
    %978 = vsyncpa [#allocation6], 1
    %s979 = scalar_lea.sflag [#allocation6], 1
    %980 = vsyncpa %s979, 1

</llo_original>
